<compile_context>
chip_gen: v7x
topology: tpu7x:2x2x1
jax: 0.10.0
libtpu: 0.0.40
codegen_flags: <defaults>
</compile_context>

<pallas_src>
import functools

import jax
import jax.numpy as jnp
from jax import lax
from jax.experimental import pallas as pl
from jax.experimental.pallas import tpu as pltpu


# ------------------------------ small helpers --------------------------------

def _row_tile(m):
    """Largest row tile <= 256 dividing m while leaving >= 2 grid steps (pipeline / megacore)."""
    for t in (256, 128, 64, 32, 16, 8):
        if m % t == 0 and m // t >= 2:
            return t
    for t in (512, 256, 128, 64, 32, 16, 8):
        if m % t == 0:
            return t
    return m  # TODO(synk): pad/mask ragged row counts instead of one giant block.


_PARALLEL = pltpu.CompilerParams(dimension_semantics=("parallel",))

_NEG100 = -100.0      # torch.binary_cross_entropy clamps log terms at -100
_EPS_NORM = 1e-30     # zero-row guard under rsqrt


def _bce_terms(z, y):
    """Logit-space BCE with 2 exp + 1 log per element.

    sp = softplus(-z);  sigmoid(z) = exp(-sp);  log p = -sp;  log(1-p) = -sp - z.
    """
    sp = jnp.maximum(-z, 0.0) + jnp.log(1.0 + jnp.exp(-jnp.abs(z)))
    p = jnp.exp(-sp)
    log_p = jnp.maximum(-sp, _NEG100)
    log_1mp = jnp.maximum(-sp - z, _NEG100)
    bce = -(y * log_p + (1.0 - y) * log_1mp)
    return p, bce


# ------------------------------ Pallas kernels --------------------------------

def _sigmoid_linear_kernel(x_ref, w_ref, b_ref, p_ref):
    # p = sigmoid(x @ W + b); W arrives pre-cast to bf16, f32 accumulate, f32 elementwise.
    z = jnp.dot(x_ref[...].astype(jnp.bfloat16), w_ref[...],
                preferred_element_type=jnp.float32) + b_ref[...]
    p_ref[...] = jax.nn.sigmoid(z)


def _sigmoid_linear_bwd_kernel(g_ref, p_ref, wT_ref, dx_ref):
    # d/dx of sigmoid(x @ W + b): dz = g * p * (1 - p); dx = dz @ W^T (W^T pre-transposed bf16).
    p = p_ref[...]
    dz = g_ref[...] * p * (1.0 - p)
    dx_ref[...] = jnp.dot(dz.astype(jnp.bfloat16), wT_ref[...],
                          preferred_element_type=jnp.float32)


def _vat_bce_fwd_kernel(x_ref, d_ref, w_ref, b_ref, y_ref, loss_ref, p_ref,
                        *, xi, inv_count):
    # FUSED power-iteration forward: row-norm(d) -> r = xi*d_hat -> clip(x+r) -> matmul ->
    # sigmoid -> logit-BCE per-tile partial.  x_adv stays in VMEM/vregs.
    d = d_ref[...]
    inv = lax.rsqrt(jnp.maximum(jnp.sum(d * d, axis=-1, keepdims=True), _EPS_NORM))
    x_adv = jnp.clip(x_ref[...] + (xi * inv) * d, 0.0, 1.0)
    z = jnp.dot(x_adv.astype(jnp.bfloat16), w_ref[...],
                preferred_element_type=jnp.float32) + b_ref[...]
    p, bce = _bce_terms(z, y_ref[...])
    p_ref[...] = p.astype(p_ref.dtype)                      # bf16 residual for the backward
    partial = jnp.sum(bce) * inv_count
    loss_ref[...] = jnp.zeros(loss_ref.shape, loss_ref.dtype) + partial   # per-tile partial


def _vat_bce_bwd_kernel(s_ref, p_ref, y_ref, x_ref, d_ref, wT_ref, dd_ref, *, xi):
    # FUSED power-iteration backward, emits dL/dd directly:
    #   dL/dx_adv = scale * (p - y) @ W^T
    #   gate through x_adv = clip(x + xi*d_hat, 0, 1)
    #   dL/dd = (xi/||d||) * (dr - (dr . d_hat) d_hat)       (L2-normalize Jacobian)
    dz = p_ref[...].astype(jnp.float32) - y_ref[...]
    dxa = jnp.dot(dz.astype(jnp.bfloat16), wT_ref[...],
                  preferred_element_type=jnp.float32) * s_ref[0, 0]
    d = d_ref[...]
    inv = lax.rsqrt(jnp.maximum(jnp.sum(d * d, axis=-1, keepdims=True), _EPS_NORM))
    dhat = d * inv
    xpre = x_ref[...] + xi * dhat
    dr = jnp.where((xpre >= 0.0) & (xpre <= 1.0), dxa, 0.0)
    proj = jnp.sum(dr * dhat, axis=-1, keepdims=True)
    dd_ref[...] = (xi * inv) * (dr - proj * dhat)


def _finalize_bce_kernel(x_ref, d_ref, w_ref, b_ref, y_ref,
                         radv_ref, dhat_ref, loss_ref, *, epsilon, inv_count):
    # Fused VAT tail: one row norm -> d_hat, r_adv = eps*d_hat, x_adv kept in VMEM only,
    # final frame BCE partial.  Stores only what the caller consumes (d_hat, r_adv, loss).
    d = d_ref[...]
    inv = lax.rsqrt(jnp.maximum(jnp.sum(d * d, axis=-1, keepdims=True), _EPS_NORM))
    dhat = d * inv
    radv = epsilon * dhat
    dhat_ref[...] = dhat
    radv_ref[...] = radv
    x_adv = jnp.clip(x_ref[...] + radv, 0.0, 1.0)
    z = jnp.dot(x_adv.astype(jnp.bfloat16), w_ref[...],
                preferred_element_type=jnp.float32) + b_ref[...]
    _, bce = _bce_terms(z, y_ref[...])
    loss_ref[...] = jnp.zeros(loss_ref.shape, loss_ref.dtype) + jnp.sum(bce) * inv_count


# --------------------------- pallas_call wrappers ------------------------------

def _sigmoid_linear_fwd_call(x2d, w_bf, b):
    M, F = x2d.shape
    N = w_bf.shape[1]
    tm = _row_tile(M)
    return pl.pallas_call(
        _sigmoid_linear_kernel,
        out_shape=jax.ShapeDtypeStruct((M, N), jnp.float32),
        grid=(M // tm,),
        in_specs=[pl.BlockSpec((tm, F), lambda i: (i, 0)),
                  pl.BlockSpec((F, N), lambda i: (0, 0)),
                  pl.BlockSpec((1, N), lambda i: (0, 0))],
        out_specs=pl.BlockSpec((tm, N), lambda i: (i, 0)),
        compiler_params=_PARALLEL,
    )(x2d, w_bf, b)


def _sigmoid_linear_bwd_call(g, p, wT_bf):
    M, N = p.shape
    F = wT_bf.shape[1]
    tm = _row_tile(M)
    return pl.pallas_call(
        _sigmoid_linear_bwd_kernel,
        out_shape=jax.ShapeDtypeStruct((M, F), jnp.float32),
        grid=(M // tm,),
        in_specs=[pl.BlockSpec((tm, N), lambda i: (i, 0)),
                  pl.BlockSpec((tm, N), lambda i: (i, 0)),
                  pl.BlockSpec((N, F), lambda i: (0, 0))],
        out_specs=pl.BlockSpec((tm, F), lambda i: (i, 0)),
        compiler_params=_PARALLEL,
    )(g, p, wT_bf)


@jax.custom_vjp
def _sigmoid_linear_ad(x2d, w_bf, wT_bf, b):
    return _sigmoid_linear_fwd_call(x2d, w_bf, b)


def _sigmoid_linear_ad_fwd(x2d, w_bf, wT_bf, b):
    p = _sigmoid_linear_fwd_call(x2d, w_bf, b)
    return p, (p, w_bf, wT_bf, b)


def _sigmoid_linear_ad_bwd(res, g):
    p, w_bf, wT_bf, b = res
    dx = _sigmoid_linear_bwd_call(g, p, wT_bf)
    # TODO(synk): weight/bias grads are unused by the VAT power iteration -> zeros (DCE'd).
    return dx, jnp.zeros_like(w_bf), jnp.zeros_like(wT_bf), jnp.zeros_like(b)


_sigmoid_linear_ad.defvjp(_sigmoid_linear_ad_fwd, _sigmoid_linear_ad_bwd)


def _vat_bce_fwd_call(d2d, x2d, w_bf, b, y, xi):
    M, F = x2d.shape
    K = w_bf.shape[1]
    tm = _row_tile(M)
    gm = M // tm
    kern = functools.partial(_vat_bce_fwd_kernel, xi=float(xi), inv_count=1.0 / (M * K))
    parts, p = pl.pallas_call(
        kern,
        out_shape=(jax.ShapeDtypeStruct((gm * 8, 128), jnp.float32),   # per-tile loss partials
                   jax.ShapeDtypeStruct((M, K), jnp.bfloat16)),        # sigmoid residual
        grid=(gm,),
        in_specs=[pl.BlockSpec((tm, F), lambda i: (i, 0)),     # x
                  pl.BlockSpec((tm, F), lambda i: (i, 0)),     # d
                  pl.BlockSpec((F, K), lambda i: (0, 0)),      # W (bf16, resident)
                  pl.BlockSpec((1, K), lambda i: (0, 0)),      # bias (f32)
                  pl.BlockSpec((tm, K), lambda i: (i, 0))],    # y = frame_ref
        out_specs=(pl.BlockSpec((8, 128), lambda i: (i, 0)),
                   pl.BlockSpec((tm, K), lambda i: (i, 0))),
        compiler_params=_PARALLEL,
    )(x2d, d2d, w_bf, b, y)
    loss = jnp.sum(parts.reshape(gm, -1)[:, 0])
    return loss, p


def _vat_bce_bwd_call(g, p, y, x2d, d2d, wT_bf, xi):
    M, F = x2d.shape
    K = p.shape[1]
    tm = _row_tile(M)
    scale = (jnp.asarray(g, jnp.float32) / (M * K)).reshape(1, 1)   # upstream g * 1/count
    kern = functools.partial(_vat_bce_bwd_kernel, xi=float(xi))
    return pl.pallas_call(
        kern,
        out_shape=jax.ShapeDtypeStruct((M, F), jnp.float32),
        grid=(M // tm,),
        in_specs=[pl.BlockSpec(memory_space=pltpu.MemorySpace.SMEM),  # scalar scale
                  pl.BlockSpec((tm, K), lambda i: (i, 0)),            # p (bf16)
                  pl.BlockSpec((tm, K), lambda i: (i, 0)),            # y
                  pl.BlockSpec((tm, F), lambda i: (i, 0)),            # x
                  pl.BlockSpec((tm, F), lambda i: (i, 0)),            # d
                  pl.BlockSpec((K, F), lambda i: (0, 0))],            # W^T (bf16, resident)
        out_specs=pl.BlockSpec((tm, F), lambda i: (i, 0)),
        compiler_params=_PARALLEL,
    )(scale, p, y, x2d, d2d, wT_bf)


@functools.partial(jax.custom_vjp, nondiff_argnums=(0,))
def _vat_bce_loss(xi, d2d, x2d, w_bf, wT_bf, b, y):
    loss, _ = _vat_bce_fwd_call(d2d, x2d, w_bf, b, y, xi)
    return loss


def _vat_bce_loss_fwd(xi, d2d, x2d, w_bf, wT_bf, b, y):
    loss, p = _vat_bce_fwd_call(d2d, x2d, w_bf, b, y, xi)
    return loss, (p, y, x2d, d2d, w_bf, wT_bf, b)


def _vat_bce_loss_bwd(xi, res, g):
    p, y, x2d, d2d, w_bf, wT_bf, b = res
    dd = _vat_bce_bwd_call(g, p, y, x2d, d2d, wT_bf, xi)
    # TODO(synk): only the d cotangent is used by the power iteration (model.zero_grad()
    # in the torch reference); x/W/b/y cotangents are returned as zeros and DCE'd.
    return (dd, jnp.zeros_like(x2d), jnp.zeros_like(w_bf),
            jnp.zeros_like(wT_bf), jnp.zeros_like(b), jnp.zeros_like(y))


_vat_bce_loss.defvjp(_vat_bce_loss_fwd, _vat_bce_loss_bwd)


def _finalize_bce_call(x2d, d2d, w_bf, b, y, epsilon):
    M, F = x2d.shape
    K = w_bf.shape[1]
    tm = _row_tile(M)
    gm = M // tm
    kern = functools.partial(_finalize_bce_kernel, epsilon=float(epsilon),
                             inv_count=1.0 / (M * K))
    shp = jax.ShapeDtypeStruct((M, F), jnp.float32)
    blk = pl.BlockSpec((tm, F), lambda i: (i, 0))
    radv, dhat, parts = pl.pallas_call(
        kern,
        out_shape=(shp, shp, jax.ShapeDtypeStruct((gm * 8, 128), jnp.float32)),
        grid=(gm,),
        in_specs=[blk,                                        # x
                  blk,                                        # d
                  pl.BlockSpec((F, K), lambda i: (0, 0)),     # W (bf16)
                  pl.BlockSpec((1, K), lambda i: (0, 0)),     # bias
                  pl.BlockSpec((tm, K), lambda i: (i, 0))],   # y = frame_ref
        out_specs=(blk, blk, pl.BlockSpec((8, 128), lambda i: (i, 0))),
        compiler_params=_PARALLEL,
    )(x2d, d2d, w_bf, b, y)
    vat_loss = jnp.sum(parts.reshape(gm, -1)[:, 0])
    return radv, dhat, vat_loss


# ------------------------------ model & VAT ------------------------------------

def model_apply(params, x):
    """Synthetic onset/activation/frame heads: sigmoid(x2d @ W + b) split into three K-wide heads.

    TODO(synk): the ConvStack / bi-LSTM stacks of the original module have no clean single
    Pallas-kernel equivalent; a linear+sigmoid 3-head stand-in is used for the perturbed model.
    """
    B, C, T, F = x.shape
    x2d = x.reshape(B * C * T, F)
    heads = _sigmoid_linear_fwd_call(x2d, params["w"].astype(jnp.bfloat16), params["b"])
    K = heads.shape[-1] // 3
    heads = heads.reshape(B, C * T, 3, K)
    return heads[..., 0, :], heads[..., 1, :], heads[..., 2, :]


def _l2_normalize_rows(d):
    return d * lax.rsqrt(jnp.maximum(jnp.sum(d * d, axis=-1, keepdims=True), _EPS_NORM))


def binary_kl_div_jax(y_pred, y_ref):
    # F.kl_div(p.log(), q, reduction='batchmean') on the stacked (prob, 1-prob) pairs, written
    # elementwise so the lane-dense (..., K) layout is kept (no trailing axis of size 2).
    q = jnp.clip(y_pred, 0.0, 0.9999)
    p = jnp.clip(y_ref, 0.0, 0.9999)
    t0 = jnp.where(q > 0.0, q * (jnp.log(q) - jnp.log(p)), 0.0)
    t1 = (1.0 - q) * (jnp.log(1.0 - q) - jnp.log(1.0 - p))   # 1-q >= 1e-4 after the clamp
    return jnp.sum(t0 + t1) / y_pred.shape[0]


def stepwise_vat(params, x, key, *, XI, epsilon, n_power, KL_Div=False):
    """JAX/Pallas equivalent of stepwise_VAT.forward; returns (vat_loss, r_adv, d_hat)."""
    B, C, T, F = x.shape
    M = B * C * T
    w, b = params["w"], params["b"]
    K = w.shape[1] // 3

    # Only the frame head feeds the VAT loss -> slice once, cast to bf16 once (halves the
    # resident weight DMA bytes across all calls) and pre-transpose once for the backward MXU.
    wf32 = w[:, 2 * K:]
    wf_bf = wf32.astype(jnp.bfloat16)                   # (F, K)
    wfT_bf = jnp.transpose(wf32).astype(jnp.bfloat16)   # (K, F)
    bf_ = b[:, 2 * K:]                                  # bias stays f32 (added post-accumulate)

    x2d = x.reshape(M, F)

    # reference pass (torch.no_grad())
    frame_ref = lax.stop_gradient(_sigmoid_linear_fwd_call(x2d, wf_bf, bf_))   # (M, K)

    d2d = jax.random.normal(key, (M, F), dtype=x.dtype)       # torch.randn_like(x)

    # Power iteration.  torch scales d.grad by 1e10 before re-normalizing, which cancels under
    # the subsequent L2 normalization and is dropped (avoids f32 overflow -> nan).
    if KL_Div:
        # TODO(synk): KL branch keeps the normalize/clip glue and the KL reduction in XLA.
        def loss_wrt_d(d_):
            x_adv2d = jnp.clip(x2d + XI * _l2_normalize_rows(d_), 0.0, 1.0)
            frame_pred = _sigmoid_linear_ad(x_adv2d, wf_bf, wfT_bf, bf_)
            return binary_kl_div_jax(frame_pred.reshape(B, C * T, K),
                                     frame_ref.reshape(B, C * T, K))
        grad_fn = jax.grad(loss_wrt_d)
        d2d = lax.fori_loop(0, n_power, lambda _, dd: grad_fn(dd), d2d)
    else:
        # Fully fused step: 1 Pallas fwd + 1 Pallas bwd per power iteration, no XLA glue.
        def power_step(_, dd):
            return jax.grad(_vat_bce_loss, argnums=1)(
                XI, dd, x2d, wf_bf, wfT_bf, bf_, frame_ref)
        d2d = lax.fori_loop(0, n_power, power_step, d2d)

    # Fused tail: row norm -> d_hat, r_adv = eps*d_hat, clip(x+r_adv) kept on-chip, final BCE.
    r_adv2d, d_hat2d, vat_loss = _finalize_bce_call(x2d, d2d, wf_bf, bf_, frame_ref, epsilon)

    if KL_Div:
        x_adv2d = jnp.clip(x2d + r_adv2d, 0.0, 1.0)
        frame_pred = _sigmoid_linear_fwd_call(x_adv2d, wf_bf, bf_)
        vat_loss = binary_kl_div_jax(frame_pred.reshape(B, C * T, K),
                                     frame_ref.reshape(B, C * T, K))

    return vat_loss, r_adv2d.reshape(x.shape), d_hat2d.reshape(x.shape)


# ---------------------------------- main ----------------------------------------

if __name__ == "__main__":
    key = jax.random.PRNGKey(0)
    kx, kw, kd = jax.random.split(key, 3)

    # x : (B, C, T, F) spectrogram-like frames in [0, 1]; K pitch bins per head.
    # K chosen so every head width is lane-dense (multiples of 128): frame head = 128, all = 384.
    B, C, T, F, K = 2, 1, 32, 128, 128
    x = jax.random.uniform(kx, (B, C, T, F), dtype=jnp.float32)

    # deterministic synthetic model parameters (linear + sigmoid 3-head stand-in for CNN/LSTM)
    w = jax.random.normal(kw, (F, 3 * K), dtype=jnp.float32) * (1.0 / jnp.sqrt(F))
    b = jnp.zeros((1, 3 * K), dtype=jnp.float32)
    params = {"w": w, "b": b}

    vat_fn = jax.jit(functools.partial(stepwise_vat, XI=1e-5, epsilon=10.0,
                                       n_power=1, KL_Div=False))
    vat_loss, r_adv, d_hat = vat_fn(params, x, kd)
    jax.block_until_ready((vat_loss, r_adv, d_hat))

    # mirror the PyTorch asserts in stepwise_VAT.forward
    assert not bool(jnp.isnan(r_adv).any()), "r_adv contains nan"
    assert not bool(jnp.isinf(r_adv).any()), "r_adv contains nan"
    assert not bool(jnp.isnan(vat_loss)), "vat_loss contains nan"

    # full three-head forward (onset, activation, frame) mirroring the module's forward
    onset, activation, frame = jax.jit(model_apply)(params, x)
    jax.block_until_ready((onset, activation, frame))

    print("KERNEL_OK")
</pallas_src>

<mosaic_0001>
module attributes {stable_mosaic.version = 11 : i64} {
  func.func @_sigmoid_linear_kernel(%arg0: i32, %arg1: memref<32x128xf32, #tpu.memory_space<vmem>>, %arg2: memref<128x128xbf16, #tpu.memory_space<vmem>>, %arg3: memref<1x128xf32, #tpu.memory_space<vmem>>, %arg4: memref<32x128xf32, #tpu.memory_space<vmem>>) attributes {dimension_semantics = [#tpu.dimension_semantics<parallel>], iteration_bounds = array<i64: 2>, scalar_prefetch = 0 : i64, scratch_operands = 0 : i64, tpu.core_type = #tpu.core_type<tc>, window_params = [{transform_indices = @transform_0, window_bounds = array<i64: 32, 128>}, {pipeline_mode = #tpu.pipeline_mode<synchronous>, transform_indices = @transform_1, window_bounds = array<i64: 128, 128>}, {pipeline_mode = #tpu.pipeline_mode<synchronous>, transform_indices = @transform_2, window_bounds = array<i64: 1, 128>}, {transform_indices = @transform_3, window_bounds = array<i64: 32, 128>}]} {
    %c0 = arith.constant 0 : index
    %c0_0 = arith.constant 0 : index
    %0 = vector.load %arg1[%c0, %c0_0] : memref<32x128xf32, #tpu.memory_space<vmem>>, vector<32x128xf32>
    %1 = arith.truncf %0 : vector<32x128xf32> to vector<32x128xbf16>
    %c0_1 = arith.constant 0 : index
    %c0_2 = arith.constant 0 : index
    %2 = vector.load %arg2[%c0_1, %c0_2] : memref<128x128xbf16, #tpu.memory_space<vmem>>, vector<128x128xbf16>
    %cst = arith.constant dense<0.000000e+00> : vector<32x128xf32>
    %3 = tpu.matmul %1, %2, %cst {dimension_numbers = #tpu.dot_dimension_numbers<[1], [0], [0], [1], [0, 0, 1, 1], [], []>} : vector<32x128xbf16>, vector<128x128xbf16>, vector<32x128xf32> -> vector<32x128xf32>
    %c0_3 = arith.constant 0 : index
    %c0_4 = arith.constant 0 : index
    %4 = vector.load %arg3[%c0_3, %c0_4] : memref<1x128xf32, #tpu.memory_space<vmem>>, vector<1x128xf32>
    %5 = vector.broadcast %4 : vector<1x128xf32> to vector<32x128xf32>
    %6 = arith.addf %3, %5 : vector<32x128xf32>
    %7 = arith.negf %6 : vector<32x128xf32>
    %8 = math.exp %7 : vector<32x128xf32>
    %cst_5 = arith.constant 1.000000e+00 : f32
    %9 = vector.broadcast %cst_5 : f32 to vector<32x128xf32>
    %10 = arith.addf %9, %8 : vector<32x128xf32>
    %11 = arith.divf %9, %10 : vector<32x128xf32>
    %c0_6 = arith.constant 0 : index
    %c0_7 = arith.constant 0 : index
    %12 = vector.load %arg4[%c0_6, %c0_7] : memref<32x128xf32, #tpu.memory_space<vmem>>, vector<32x128xf32>
    tpu.vector_store %arg4[%c0_6, %c0_7], %11 {strides = array<i32>} : memref<32x128xf32, #tpu.memory_space<vmem>>, vector<32x128xf32>,
    return
  }
  func.func @transform_0(%arg0: i32) -> (i32, i32) {
    %c0_i32 = arith.constant 0 : i32
    %c0_i32_0 = arith.constant 0 : i32
    return %arg0, %c0_i32 : i32, i32
  }
  func.func @transform_1(%arg0: i32) -> (i32, i32) {
    %c0_i32 = arith.constant 0 : i32
    %c0_i32_0 = arith.constant 0 : i32
    %c0_i32_1 = arith.constant 0 : i32
    return %c0_i32, %c0_i32_0 : i32, i32
  }
  func.func @transform_2(%arg0: i32) -> (i32, i32) {
    %c0_i32 = arith.constant 0 : i32
    %c0_i32_0 = arith.constant 0 : i32
    %c0_i32_1 = arith.constant 0 : i32
    return %c0_i32, %c0_i32_0 : i32, i32
  }
  func.func @transform_3(%arg0: i32) -> (i32, i32) {
    %c0_i32 = arith.constant 0 : i32
    %c0_i32_0 = arith.constant 0 : i32
    return %arg0, %c0_i32 : i32, i32
  }
}

module attributes {stable_mosaic.version = 11 : i64} {
  func.func @_vat_bce_fwd_kernel(%arg0: i32, %arg1: memref<32x128xf32, #tpu.memory_space<vmem>>, %arg2: memref<32x128xf32, #tpu.memory_space<vmem>>, %arg3: memref<128x128xbf16, #tpu.memory_space<vmem>>, %arg4: memref<1x128xf32, #tpu.memory_space<vmem>>, %arg5: memref<32x128xf32, #tpu.memory_space<vmem>>, %arg6: memref<8x128xf32, #tpu.memory_space<vmem>>, %arg7: memref<32x128xbf16, #tpu.memory_space<vmem>>) attributes {dimension_semantics = [#tpu.dimension_semantics<parallel>], iteration_bounds = array<i64: 2>, scalar_prefetch = 0 : i64, scratch_operands = 0 : i64, tpu.core_type = #tpu.core_type<tc>, window_params = [{transform_indices = @transform_0, window_bounds = array<i64: 32, 128>}, {transform_indices = @transform_1, window_bounds = array<i64: 32, 128>}, {pipeline_mode = #tpu.pipeline_mode<synchronous>, transform_indices = @transform_2, window_bounds = array<i64: 128, 128>}, {pipeline_mode = #tpu.pipeline_mode<synchronous>, transform_indices = @transform_3, window_bounds = array<i64: 1, 128>}, {transform_indices = @transform_4, window_bounds = array<i64: 32, 128>}, {transform_indices = @transform_5, window_bounds = array<i64: 8, 128>}, {transform_indices = @transform_6, window_bounds = array<i64: 32, 128>}]} {
    %c0 = arith.constant 0 : index
    %c0_0 = arith.constant 0 : index
    %0 = vector.load %arg2[%c0, %c0_0] : memref<32x128xf32, #tpu.memory_space<vmem>>, vector<32x128xf32>
    %1 = arith.mulf %0, %0 : vector<32x128xf32>
    %cst = arith.constant dense<0.000000e+00> : vector<32xf32>
    %2 = vector.multi_reduction <add>, %1, %cst [1] : vector<32x128xf32> to vector<32xf32>
    %3 = vector.shape_cast %2 : vector<32xf32> to vector<32x1xf32>
    %cst_1 = arith.constant 1.000000e-30 : f32
    %4 = vector.broadcast %cst_1 : f32 to vector<32x1xf32>
    %5 = arith.maximumf %3, %4 : vector<32x1xf32>
    %6 = math.rsqrt %5 : vector<32x1xf32>
    %c0_2 = arith.constant 0 : index
    %c0_3 = arith.constant 0 : index
    %7 = vector.load %arg1[%c0_2, %c0_3] : memref<32x128xf32, #tpu.memory_space<vmem>>, vector<32x128xf32>
    %cst_4 = arith.constant 9.99999974E-6 : f32
    %8 = vector.broadcast %cst_4 : f32 to vector<32x1xf32>
    %9 = arith.mulf %8, %6 : vector<32x1xf32>
    %10 = vector.broadcast %9 : vector<32x1xf32> to vector<32x128xf32>
    %11 = arith.mulf %10, %0 : vector<32x128xf32>
    %12 = arith.addf %7, %11 : vector<32x128xf32>
    %cst_5 = arith.constant 0.000000e+00 : f32
    %cst_6 = arith.constant 1.000000e+00 : f32
    %13 = vector.broadcast %cst_5 : f32 to vector<32x128xf32>
    %14 = arith.maximumf %13, %12 : vector<32x128xf32>
    %15 = vector.broadcast %cst_6 : f32 to vector<32x128xf32>
    %16 = arith.minimumf %15, %14 : vector<32x128xf32>
    %17 = arith.truncf %16 : vector<32x128xf32> to vector<32x128xbf16>
    %c0_7 = arith.constant 0 : index
    %c0_8 = arith.constant 0 : index
    %18 = vector.load %arg3[%c0_7, %c0_8] : memref<128x128xbf16, #tpu.memory_space<vmem>>, vector<128x128xbf16>
    %cst_9 = arith.constant dense<0.000000e+00> : vector<32x128xf32>
    %19 = tpu.matmul %17, %18, %cst_9 {dimension_numbers = #tpu.dot_dimension_numbers<[1], [0], [0], [1], [0, 0, 1, 1], [], []>} : vector<32x128xbf16>, vector<128x128xbf16>, vector<32x128xf32> -> vector<32x128xf32>
    %c0_10 = arith.constant 0 : index
    %c0_11 = arith.constant 0 : index
    %20 = vector.load %arg4[%c0_10, %c0_11] : memref<1x128xf32, #tpu.memory_space<vmem>>, vector<1x128xf32>
    %21 = vector.broadcast %20 : vector<1x128xf32> to vector<32x128xf32>
    %22 = arith.addf %19, %21 : vector<32x128xf32>
    %c0_12 = arith.constant 0 : index
    %c0_13 = arith.constant 0 : index
    %23 = vector.load %arg5[%c0_12, %c0_13] : memref<32x128xf32, #tpu.memory_space<vmem>>, vector<32x128xf32>
    %cst_14 = arith.constant 0.000000e+00 : f32
    %24 = vector.broadcast %cst_14 : f32 to vector<32x128xf32>
    %25 = arith.subf %24, %22 : vector<32x128xf32>
    %cst_15 = arith.constant 0.000000e+00 : f32
    %26 = vector.broadcast %cst_15 : f32 to vector<32x128xf32>
    %27 = arith.maximumf %25, %26 : vector<32x128xf32>
    %28 = math.absf %22 : vector<32x128xf32>
    %cst_16 = arith.constant 0.000000e+00 : f32
    %29 = vector.broadcast %cst_16 : f32 to vector<32x128xf32>
    %30 = arith.subf %29, %28 : vector<32x128xf32>
    %31 = math.exp %30 : vector<32x128xf32>
    %cst_17 = arith.constant 1.000000e+00 : f32
    %32 = vector.broadcast %cst_17 : f32 to vector<32x128xf32>
    %33 = arith.addf %32, %31 : vector<32x128xf32>
    %34 = math.log %33 : vector<32x128xf32>
    %35 = arith.addf %27, %34 : vector<32x128xf32>
    %cst_18 = arith.constant 0.000000e+00 : f32
    %36 = vector.broadcast %cst_18 : f32 to vector<32x128xf32>
    %37 = arith.subf %36, %35 : vector<32x128xf32>
    %38 = math.exp %37 : vector<32x128xf32>
    %cst_19 = arith.constant 0.000000e+00 : f32
    %39 = vector.broadcast %cst_19 : f32 to vector<32x128xf32>
    %40 = arith.subf %39, %35 : vector<32x128xf32>
    %cst_20 = arith.constant -1.000000e+02 : f32
    %41 = vector.broadcast %cst_20 : f32 to vector<32x128xf32>
    %42 = arith.maximumf %40, %41 : vector<32x128xf32>
    %cst_21 = arith.constant 0.000000e+00 : f32
    %43 = vector.broadcast %cst_21 : f32 to vector<32x128xf32>
    %44 = arith.subf %43, %35 : vector<32x128xf32>
    %45 = arith.subf %44, %22 : vector<32x128xf32>
    %cst_22 = arith.constant -1.000000e+02 : f32
    %46 = vector.broadcast %cst_22 : f32 to vector<32x128xf32>
    %47 = arith.maximumf %45, %46 : vector<32x128xf32>
    %48 = arith.mulf %23, %42 : vector<32x128xf32>
    %cst_23 = arith.constant 1.000000e+00 : f32
    %49 = vector.broadcast %cst_23 : f32 to vector<32x128xf32>
    %50 = arith.subf %49, %23 : vector<32x128xf32>
    %51 = arith.mulf %50, %47 : vector<32x128xf32>
    %52 = arith.addf %48, %51 : vector<32x128xf32>
    %cst_24 = arith.constant 0.000000e+00 : f32
    %53 = vector.broadcast %cst_24 : f32 to vector<32x128xf32>
    %54 = arith.subf %53, %52 : vector<32x128xf32>
    %55 = arith.truncf %38 : vector<32x128xf32> to vector<32x128xbf16>
    %c0_25 = arith.constant 0 : index
    %c0_26 = arith.constant 0 : index
    %56 = vector.load %arg7[%c0_25, %c0_26] : memref<32x128xbf16, #tpu.memory_space<vmem>>, vector<32x128xbf16>
    tpu.vector_store %arg7[%c0_25, %c0_26], %55 {strides = array<i32>} : memref<32x128xbf16, #tpu.memory_space<vmem>>, vector<32x128xbf16>,
    %57 = vector.shape_cast %54 : vector<32x128xf32> to vector<1x32x128xf32>
    %cst_27 = arith.constant dense<0.000000e+00> : vector<1xf32>
    %58 = vector.multi_reduction <add>, %57, %cst_27 [1, 2] : vector<1x32x128xf32> to vector<1xf32>
    %59 = vector.shape_cast %58 : vector<1xf32> to vector<1x1x1xf32>
    %60 = vector.extract %59[0, 0, 0] : f32 from vector<1x1x1xf32>
    %cst_28 = arith.constant 1.22070313E-4 : f32
    %61 = arith.mulf %60, %cst_28 : f32
    %cst_29 = arith.constant 0.000000e+00 : f32
    %62 = vector.broadcast %cst_29 : f32 to vector<8x128xf32>
    %63 = vector.broadcast %61 : f32 to vector<8x128xf32>
    %64 = arith.addf %62, %63 : vector<8x128xf32>
    %c0_30 = arith.constant 0 : index
    %c0_31 = arith.constant 0 : index
    %65 = vector.load %arg6[%c0_30, %c0_31] : memref<8x128xf32, #tpu.memory_space<vmem>>, vector<8x128xf32>
    tpu.vector_store %arg6[%c0_30, %c0_31], %64 {strides = array<i32>} : memref<8x128xf32, #tpu.memory_space<vmem>>, vector<8x128xf32>,
    return
  }
  func.func @transform_0(%arg0: i32) -> (i32, i32) {
    %c0_i32 = arith.constant 0 : i32
    %c0_i32_0 = arith.constant 0 : i32
    return %arg0, %c0_i32 : i32, i32
  }
  func.func @transform_1(%arg0: i32) -> (i32, i32) {
    %c0_i32 = arith.constant 0 : i32
    %c0_i32_0 = arith.constant 0 : i32
    return %arg0, %c0_i32 : i32, i32
  }
  func.func @transform_2(%arg0: i32) -> (i32, i32) {
    %c0_i32 = arith.constant 0 : i32
    %c0_i32_0 = arith.constant 0 : i32
    %c0_i32_1 = arith.constant 0 : i32
    return %c0_i32, %c0_i32_0 : i32, i32
  }
  func.func @transform_3(%arg0: i32) -> (i32, i32) {
    %c0_i32 = arith.constant 0 : i32
    %c0_i32_0 = arith.constant 0 : i32
    %c0_i32_1 = arith.constant 0 : i32
    return %c0_i32, %c0_i32_0 : i32, i32
  }
  func.func @transform_4(%arg0: i32) -> (i32, i32) {
    %c0_i32 = arith.constant 0 : i32
    %c0_i32_0 = arith.constant 0 : i32
    return %arg0, %c0_i32 : i32, i32
  }
  func.func @transform_5(%arg0: i32) -> (i32, i32) {
    %c0_i32 = arith.constant 0 : i32
    %c0_i32_0 = arith.constant 0 : i32
    return %arg0, %c0_i32 : i32, i32
  }
  func.func @transform_6(%arg0: i32) -> (i32, i32) {
    %c0_i32 = arith.constant 0 : i32
    %c0_i32_0 = arith.constant 0 : i32
    return %arg0, %c0_i32 : i32, i32
  }
}

module attributes {stable_mosaic.version = 11 : i64} {
  func.func @_vat_bce_bwd_kernel(%arg0: i32, %arg1: memref<1x1xf32, #tpu.memory_space<smem>>, %arg2: memref<32x128xbf16, #tpu.memory_space<vmem>>, %arg3: memref<32x128xf32, #tpu.memory_space<vmem>>, %arg4: memref<32x128xf32, #tpu.memory_space<vmem>>, %arg5: memref<32x128xf32, #tpu.memory_space<vmem>>, %arg6: memref<128x128xbf16, #tpu.memory_space<vmem>>, %arg7: memref<32x128xf32, #tpu.memory_space<vmem>>) attributes {dimension_semantics = [#tpu.dimension_semantics<parallel>], iteration_bounds = array<i64: 2>, scalar_prefetch = 0 : i64, scratch_operands = 0 : i64, tpu.core_type = #tpu.core_type<tc>, window_params = [{transform_indices = @transform_0, window_bounds = array<i64: 1, 1>}, {transform_indices = @transform_1, window_bounds = array<i64: 32, 128>}, {transform_indices = @transform_2, window_bounds = array<i64: 32, 128>}, {transform_indices = @transform_3, window_bounds = array<i64: 32, 128>}, {transform_indices = @transform_4, window_bounds = array<i64: 32, 128>}, {pipeline_mode = #tpu.pipeline_mode<synchronous>, transform_indices = @transform_5, window_bounds = array<i64: 128, 128>}, {transform_indices = @transform_6, window_bounds = array<i64: 32, 128>}]} {
    %c0 = arith.constant 0 : index
    %c0_0 = arith.constant 0 : index
    %0 = vector.load %arg2[%c0, %c0_0] : memref<32x128xbf16, #tpu.memory_space<vmem>>, vector<32x128xbf16>
    %1 = arith.extf %0 : vector<32x128xbf16> to vector<32x128xf32>
    %c0_1 = arith.constant 0 : index
    %c0_2 = arith.constant 0 : index
    %2 = vector.load %arg3[%c0_1, %c0_2] : memref<32x128xf32, #tpu.memory_space<vmem>>, vector<32x128xf32>
    %3 = arith.subf %1, %2 : vector<32x128xf32>
    %4 = arith.truncf %3 : vector<32x128xf32> to vector<32x128xbf16>
    %c0_3 = arith.constant 0 : index
    %c0_4 = arith.constant 0 : index
    %5 = vector.load %arg6[%c0_3, %c0_4] : memref<128x128xbf16, #tpu.memory_space<vmem>>, vector<128x128xbf16>
    %cst = arith.constant dense<0.000000e+00> : vector<32x128xf32>
    %6 = tpu.matmul %4, %5, %cst {dimension_numbers = #tpu.dot_dimension_numbers<[1], [0], [0], [1], [0, 0, 1, 1], [], []>} : vector<32x128xbf16>, vector<128x128xbf16>, vector<32x128xf32> -> vector<32x128xf32>
    %c0_5 = arith.constant 0 : index
    %c0_6 = arith.constant 0 : index
    %7 = memref.load %arg1[%c0_5, %c0_6] : memref<1x1xf32, #tpu.memory_space<smem>>
    %8 = vector.broadcast %7 : f32 to vector<32x128xf32>
    %9 = arith.mulf %6, %8 : vector<32x128xf32>
    %c0_7 = arith.constant 0 : index
    %c0_8 = arith.constant 0 : index
    %10 = vector.load %arg5[%c0_7, %c0_8] : memref<32x128xf32, #tpu.memory_space<vmem>>, vector<32x128xf32>
    %11 = arith.mulf %10, %10 : vector<32x128xf32>
    %cst_9 = arith.constant dense<0.000000e+00> : vector<32xf32>
    %12 = vector.multi_reduction <add>, %11, %cst_9 [1] : vector<32x128xf32> to vector<32xf32>
    %13 = vector.shape_cast %12 : vector<32xf32> to vector<32x1xf32>
    %cst_10 = arith.constant 1.000000e-30 : f32
    %14 = vector.broadcast %cst_10 : f32 to vector<32x1xf32>
    %15 = arith.maximumf %13, %14 : vector<32x1xf32>
    %16 = math.rsqrt %15 : vector<32x1xf32>
    %17 = vector.broadcast %16 : vector<32x1xf32> to vector<32x128xf32>
    %18 = arith.mulf %10, %17 : vector<32x128xf32>
    %c0_11 = arith.constant 0 : index
    %c0_12 = arith.constant 0 : index
    %19 = vector.load %arg4[%c0_11, %c0_12] : memref<32x128xf32, #tpu.memory_space<vmem>>, vector<32x128xf32>
    %cst_13 = arith.constant 9.99999974E-6 : f32
    %20 = vector.broadcast %cst_13 : f32 to vector<32x128xf32>
    %21 = arith.mulf %20, %18 : vector<32x128xf32>
    %22 = arith.addf %19, %21 : vector<32x128xf32>
    %cst_14 = arith.constant 0.000000e+00 : f32
    %23 = vector.broadcast %cst_14 : f32 to vector<32x128xf32>
    %24 = arith.cmpf oge, %22, %23 : vector<32x128xf32>
    %cst_15 = arith.constant 1.000000e+00 : f32
    %25 = vector.broadcast %cst_15 : f32 to vector<32x128xf32>
    %26 = arith.cmpf ole, %22, %25 : vector<32x128xf32>
    %27 = arith.andi %24, %26 : vector<32x128xi1>
    %cst_16 = arith.constant 0.000000e+00 : f32
    %28 = vector.broadcast %cst_16 : f32 to vector<32x128xf32>
    %29 = arith.select %27, %9, %28 : vector<32x128xi1>, vector<32x128xf32>
    %30 = arith.mulf %29, %18 : vector<32x128xf32>
    %cst_17 = arith.constant dense<0.000000e+00> : vector<32xf32>
    %31 = vector.multi_reduction <add>, %30, %cst_17 [1] : vector<32x128xf32> to vector<32xf32>
    %32 = vector.shape_cast %31 : vector<32xf32> to vector<32x1xf32>
    %cst_18 = arith.constant 9.99999974E-6 : f32
    %33 = vector.broadcast %cst_18 : f32 to vector<32x1xf32>
    %34 = arith.mulf %33, %16 : vector<32x1xf32>
    %35 = vector.broadcast %32 : vector<32x1xf32> to vector<32x128xf32>
    %36 = arith.mulf %35, %18 : vector<32x128xf32>
    %37 = arith.subf %29, %36 : vector<32x128xf32>
    %38 = vector.broadcast %34 : vector<32x1xf32> to vector<32x128xf32>
    %39 = arith.mulf %38, %37 : vector<32x128xf32>
    %c0_19 = arith.constant 0 : index
    %c0_20 = arith.constant 0 : index
    %40 = vector.load %arg7[%c0_19, %c0_20] : memref<32x128xf32, #tpu.memory_space<vmem>>, vector<32x128xf32>
    tpu.vector_store %arg7[%c0_19, %c0_20], %39 {strides = array<i32>} : memref<32x128xf32, #tpu.memory_space<vmem>>, vector<32x128xf32>,
    return
  }
  func.func @transform_0(%arg0: i32) -> (i32, i32) {
    %c0_i32 = arith.constant 0 : i32
    %c0_i32_0 = arith.constant 0 : i32
    %c0_i32_1 = arith.constant 0 : i32
    return %c0_i32, %c0_i32_0 : i32, i32
  }
  func.func @transform_1(%arg0: i32) -> (i32, i32) {
    %c0_i32 = arith.constant 0 : i32
    %c0_i32_0 = arith.constant 0 : i32
    return %arg0, %c0_i32 : i32, i32
  }
  func.func @transform_2(%arg0: i32) -> (i32, i32) {
    %c0_i32 = arith.constant 0 : i32
    %c0_i32_0 = arith.constant 0 : i32
    return %arg0, %c0_i32 : i32, i32
  }
  func.func @transform_3(%arg0: i32) -> (i32, i32) {
    %c0_i32 = arith.constant 0 : i32
    %c0_i32_0 = arith.constant 0 : i32
    return %arg0, %c0_i32 : i32, i32
  }
  func.func @transform_4(%arg0: i32) -> (i32, i32) {
    %c0_i32 = arith.constant 0 : i32
    %c0_i32_0 = arith.constant 0 : i32
    return %arg0, %c0_i32 : i32, i32
  }
  func.func @transform_5(%arg0: i32) -> (i32, i32) {
    %c0_i32 = arith.constant 0 : i32
    %c0_i32_0 = arith.constant 0 : i32
    %c0_i32_1 = arith.constant 0 : i32
    return %c0_i32, %c0_i32_0 : i32, i32
  }
  func.func @transform_6(%arg0: i32) -> (i32, i32) {
    %c0_i32 = arith.constant 0 : i32
    %c0_i32_0 = arith.constant 0 : i32
    return %arg0, %c0_i32 : i32, i32
  }
}

module attributes {stable_mosaic.version = 11 : i64} {
  func.func @_finalize_bce_kernel(%arg0: i32, %arg1: memref<32x128xf32, #tpu.memory_space<vmem>>, %arg2: memref<32x128xf32, #tpu.memory_space<vmem>>, %arg3: memref<128x128xbf16, #tpu.memory_space<vmem>>, %arg4: memref<1x128xf32, #tpu.memory_space<vmem>>, %arg5: memref<32x128xf32, #tpu.memory_space<vmem>>, %arg6: memref<32x128xf32, #tpu.memory_space<vmem>>, %arg7: memref<32x128xf32, #tpu.memory_space<vmem>>, %arg8: memref<8x128xf32, #tpu.memory_space<vmem>>) attributes {dimension_semantics = [#tpu.dimension_semantics<parallel>], iteration_bounds = array<i64: 2>, scalar_prefetch = 0 : i64, scratch_operands = 0 : i64, tpu.core_type = #tpu.core_type<tc>, window_params = [{transform_indices = @transform_0, window_bounds = array<i64: 32, 128>}, {transform_indices = @transform_1, window_bounds = array<i64: 32, 128>}, {pipeline_mode = #tpu.pipeline_mode<synchronous>, transform_indices = @transform_2, window_bounds = array<i64: 128, 128>}, {pipeline_mode = #tpu.pipeline_mode<synchronous>, transform_indices = @transform_3, window_bounds = array<i64: 1, 128>}, {transform_indices = @transform_4, window_bounds = array<i64: 32, 128>}, {transform_indices = @transform_5, window_bounds = array<i64: 32, 128>}, {transform_indices = @transform_6, window_bounds = array<i64: 32, 128>}, {transform_indices = @transform_7, window_bounds = array<i64: 8, 128>}]} {
    %c0 = arith.constant 0 : index
    %c0_0 = arith.constant 0 : index
    %0 = vector.load %arg2[%c0, %c0_0] : memref<32x128xf32, #tpu.memory_space<vmem>>, vector<32x128xf32>
    %1 = arith.mulf %0, %0 : vector<32x128xf32>
    %cst = arith.constant dense<0.000000e+00> : vector<32xf32>
    %2 = vector.multi_reduction <add>, %1, %cst [1] : vector<32x128xf32> to vector<32xf32>
    %3 = vector.shape_cast %2 : vector<32xf32> to vector<32x1xf32>
    %cst_1 = arith.constant 1.000000e-30 : f32
    %4 = vector.broadcast %cst_1 : f32 to vector<32x1xf32>
    %5 = arith.maximumf %3, %4 : vector<32x1xf32>
    %6 = math.rsqrt %5 : vector<32x1xf32>
    %7 = vector.broadcast %6 : vector<32x1xf32> to vector<32x128xf32>
    %8 = arith.mulf %0, %7 : vector<32x128xf32>
    %cst_2 = arith.constant 1.000000e+01 : f32
    %9 = vector.broadcast %cst_2 : f32 to vector<32x128xf32>
    %10 = arith.mulf %9, %8 : vector<32x128xf32>
    %c0_3 = arith.constant 0 : index
    %c0_4 = arith.constant 0 : index
    %11 = vector.load %arg7[%c0_3, %c0_4] : memref<32x128xf32, #tpu.memory_space<vmem>>, vector<32x128xf32>
    tpu.vector_store %arg7[%c0_3, %c0_4], %8 {strides = array<i32>} : memref<32x128xf32, #tpu.memory_space<vmem>>, vector<32x128xf32>,
    %c0_5 = arith.constant 0 : index
    %c0_6 = arith.constant 0 : index
    %12 = vector.load %arg6[%c0_5, %c0_6] : memref<32x128xf32, #tpu.memory_space<vmem>>, vector<32x128xf32>
    tpu.vector_store %arg6[%c0_5, %c0_6], %10 {strides = array<i32>} : memref<32x128xf32, #tpu.memory_space<vmem>>, vector<32x128xf32>,
    %c0_7 = arith.constant 0 : index
    %c0_8 = arith.constant 0 : index
    %13 = vector.load %arg1[%c0_7, %c0_8] : memref<32x128xf32, #tpu.memory_space<vmem>>, vector<32x128xf32>
    %14 = arith.addf %13, %10 : vector<32x128xf32>
    %cst_9 = arith.constant 0.000000e+00 : f32
    %cst_10 = arith.constant 1.000000e+00 : f32
    %15 = vector.broadcast %cst_9 : f32 to vector<32x128xf32>
    %16 = arith.maximumf %15, %14 : vector<32x128xf32>
    %17 = vector.broadcast %cst_10 : f32 to vector<32x128xf32>
    %18 = arith.minimumf %17, %16 : vector<32x128xf32>
    %19 = arith.truncf %18 : vector<32x128xf32> to vector<32x128xbf16>
    %c0_11 = arith.constant 0 : index
    %c0_12 = arith.constant 0 : index
    %20 = vector.load %arg3[%c0_11, %c0_12] : memref<128x128xbf16, #tpu.memory_space<vmem>>, vector<128x128xbf16>
    %cst_13 = arith.constant dense<0.000000e+00> : vector<32x128xf32>
    %21 = tpu.matmul %19, %20, %cst_13 {dimension_numbers = #tpu.dot_dimension_numbers<[1], [0], [0], [1], [0, 0, 1, 1], [], []>} : vector<32x128xbf16>, vector<128x128xbf16>, vector<32x128xf32> -> vector<32x128xf32>
    %c0_14 = arith.constant 0 : index
    %c0_15 = arith.constant 0 : index
    %22 = vector.load %arg4[%c0_14, %c0_15] : memref<1x128xf32, #tpu.memory_space<vmem>>, vector<1x128xf32>
    %23 = vector.broadcast %22 : vector<1x128xf32> to vector<32x128xf32>
    %24 = arith.addf %21, %23 : vector<32x128xf32>
    %c0_16 = arith.constant 0 : index
    %c0_17 = arith.constant 0 : index
    %25 = vector.load %arg5[%c0_16, %c0_17] : memref<32x128xf32, #tpu.memory_space<vmem>>, vector<32x128xf32>
    %cst_18 = arith.constant 0.000000e+00 : f32
    %26 = vector.broadcast %cst_18 : f32 to vector<32x128xf32>
    %27 = arith.subf %26, %24 : vector<32x128xf32>
    %cst_19 = arith.constant 0.000000e+00 : f32
    %28 = vector.broadcast %cst_19 : f32 to vector<32x128xf32>
    %29 = arith.maximumf %27, %28 : vector<32x128xf32>
    %30 = math.absf %24 : vector<32x128xf32>
    %cst_20 = arith.constant 0.000000e+00 : f32
    %31 = vector.broadcast %cst_20 : f32 to vector<32x128xf32>
    %32 = arith.subf %31, %30 : vector<32x128xf32>
    %33 = math.exp %32 : vector<32x128xf32>
    %cst_21 = arith.constant 1.000000e+00 : f32
    %34 = vector.broadcast %cst_21 : f32 to vector<32x128xf32>
    %35 = arith.addf %34, %33 : vector<32x128xf32>
    %36 = math.log %35 : vector<32x128xf32>
    %37 = arith.addf %29, %36 : vector<32x128xf32>
    %cst_22 = arith.constant 0.000000e+00 : f32
    %38 = vector.broadcast %cst_22 : f32 to vector<32x128xf32>
    %39 = arith.subf %38, %37 : vector<32x128xf32>
    %cst_23 = arith.constant -1.000000e+02 : f32
    %40 = vector.broadcast %cst_23 : f32 to vector<32x128xf32>
    %41 = arith.maximumf %39, %40 : vector<32x128xf32>
    %cst_24 = arith.constant 0.000000e+00 : f32
    %42 = vector.broadcast %cst_24 : f32 to vector<32x128xf32>
    %43 = arith.subf %42, %37 : vector<32x128xf32>
    %44 = arith.subf %43, %24 : vector<32x128xf32>
    %cst_25 = arith.constant -1.000000e+02 : f32
    %45 = vector.broadcast %cst_25 : f32 to vector<32x128xf32>
    %46 = arith.maximumf %44, %45 : vector<32x128xf32>
    %47 = arith.mulf %25, %41 : vector<32x128xf32>
    %cst_26 = arith.constant 1.000000e+00 : f32
    %48 = vector.broadcast %cst_26 : f32 to vector<32x128xf32>
    %49 = arith.subf %48, %25 : vector<32x128xf32>
    %50 = arith.mulf %49, %46 : vector<32x128xf32>
    %51 = arith.addf %47, %50 : vector<32x128xf32>
    %cst_27 = arith.constant 0.000000e+00 : f32
    %52 = vector.broadcast %cst_27 : f32 to vector<32x128xf32>
    %53 = arith.subf %52, %51 : vector<32x128xf32>
    %cst_28 = arith.constant 0.000000e+00 : f32
    %54 = vector.broadcast %cst_28 : f32 to vector<8x128xf32>
    %55 = vector.shape_cast %53 : vector<32x128xf32> to vector<1x32x128xf32>
    %cst_29 = arith.constant dense<0.000000e+00> : vector<1xf32>
    %56 = vector.multi_reduction <add>, %55, %cst_29 [1, 2] : vector<1x32x128xf32> to vector<1xf32>
    %57 = vector.shape_cast %56 : vector<1xf32> to vector<1x1x1xf32>
    %58 = vector.extract %57[0, 0, 0] : f32 from vector<1x1x1xf32>
    %cst_30 = arith.constant 1.22070313E-4 : f32
    %59 = arith.mulf %58, %cst_30 : f32
    %60 = vector.broadcast %59 : f32 to vector<8x128xf32>
    %61 = arith.addf %54, %60 : vector<8x128xf32>
    %c0_31 = arith.constant 0 : index
    %c0_32 = arith.constant 0 : index
    %62 = vector.load %arg8[%c0_31, %c0_32] : memref<8x128xf32, #tpu.memory_space<vmem>>, vector<8x128xf32>
    tpu.vector_store %arg8[%c0_31, %c0_32], %61 {strides = array<i32>} : memref<8x128xf32, #tpu.memory_space<vmem>>, vector<8x128xf32>,
    return
  }
  func.func @transform_0(%arg0: i32) -> (i32, i32) {
    %c0_i32 = arith.constant 0 : i32
    %c0_i32_0 = arith.constant 0 : i32
    return %arg0, %c0_i32 : i32, i32
  }
  func.func @transform_1(%arg0: i32) -> (i32, i32) {
    %c0_i32 = arith.constant 0 : i32
    %c0_i32_0 = arith.constant 0 : i32
    return %arg0, %c0_i32 : i32, i32
  }
  func.func @transform_2(%arg0: i32) -> (i32, i32) {
    %c0_i32 = arith.constant 0 : i32
    %c0_i32_0 = arith.constant 0 : i32
    %c0_i32_1 = arith.constant 0 : i32
    return %c0_i32, %c0_i32_0 : i32, i32
  }
  func.func @transform_3(%arg0: i32) -> (i32, i32) {
    %c0_i32 = arith.constant 0 : i32
    %c0_i32_0 = arith.constant 0 : i32
    %c0_i32_1 = arith.constant 0 : i32
    return %c0_i32, %c0_i32_0 : i32, i32
  }
  func.func @transform_4(%arg0: i32) -> (i32, i32) {
    %c0_i32 = arith.constant 0 : i32
    %c0_i32_0 = arith.constant 0 : i32
    return %arg0, %c0_i32 : i32, i32
  }
  func.func @transform_5(%arg0: i32) -> (i32, i32) {
    %c0_i32 = arith.constant 0 : i32
    %c0_i32_0 = arith.constant 0 : i32
    return %arg0, %c0_i32 : i32, i32
  }
  func.func @transform_6(%arg0: i32) -> (i32, i32) {
    %c0_i32 = arith.constant 0 : i32
    %c0_i32_0 = arith.constant 0 : i32
    return %arg0, %c0_i32 : i32, i32
  }
  func.func @transform_7(%arg0: i32) -> (i32, i32) {
    %c0_i32 = arith.constant 0 : i32
    %c0_i32_0 = arith.constant 0 : i32
    return %arg0, %c0_i32 : i32, i32
  }
}

</mosaic_0001>

<llo_original>
// kernel: stepwise_vat.2
$region0: #{stepwise_vat.2}
  #allocation0 [shape = 'u32[]', space=smem, size = 0x4, offset = 0x4, fixed_abs, tag = 'smem constant byte address 0x4 - core index']
  #allocation1 [shape = 'u32[144,128]{1,0:T(1,128)}', space=vmem, size = 0x12000, scoped, tag = 'internal scratch']
  %s0 = inlined_call_operand.vmem [shape: f32[64,128], index: 0, kind: input, shape index: {}]
  %s1 = inlined_call_operand.vmem [shape: bf16[128,128], index: 1, kind: input, shape index: {}]
  %s2 = inlined_call_operand.vmem [shape: f32[1,128], index: 2, kind: input, shape index: {}]
  %s3 = inlined_call_operand.vmem [shape: f32[64,128], index: 3, kind: output, shape index: {}]
  %s4 = sld [smem:[#allocation0]]
  $region45: #{stepwise_vat.2} parent=0
    _
  %s6 = ssub.s32 1, %s4
  %s7 = scalar_select 0, %s6, %s4
  loop: start=0, step=1, limit=4
  $region2: #{stepwise_vat.2} parent=0 // loop_pre_header
    _
  $region3: #{stepwise_vat.2} parent=0 // loop_header
    %s9 = sphi 0, %s13
    %p10 = scmp.ge.s32.totalorder %s9, 4
    %s19 = sphi 0, %s21
    %s22 = sphi 0, %s19
    %s23 = sphi 0, %s22
    %s39 = sphi 0, %s23
    %s43 = sphi 0, %s43
    %s45 = sphi 0, %s43
    %s46 = sphi 0, %s45
    %s60 = sphi 0, %s46
    %s64 = sphi 0, %s64
    %s66 = sphi 0, %s64
    %s67 = sphi 0, %s66
    %s81 = sphi 0, %s67
    %s87 = sphi 0, %s89
    %s90 = sphi 0, %s87
    %s91 = sphi 0, %s90
    %s107 = sphi 0, %s91
  $region4: #{stepwise_vat.2} parent=0 // loop_header_branch
    %12 = sbr.rel (%p10) target = $region8
  $region5: #{stepwise_vat.2} parent=0 // loop_body
    %s14 = ssub.s32 %s9, 1
    %s15 = ssub.s32 %s9, 2
    %s16 = sadd.s32 %s9, 1
    %s17 = ssub.s32 %s9, %s16
    %p18 = scmp.eq.s32.totalorder %s17, 0
    %s20 = sadd.s32 %s19, 1
    %s21 = scalar_select %p18, %s19, %s20
    %p24 = pneg %p18
    %p25 = scmp.eq.s32.totalorder %s9, 1
    %p26 = por %p24, %p25
    %p27 = scmp.ne.s32.totalorder %s19, %s22
    %p28 = scmp.eq.s32.totalorder %s9, 0
    %p29 = por %p27, %p28
    %p30 = scmp.ne.s32.totalorder %s19, %s22
    %p31 = scmp.eq.s32.totalorder %s14, 1
    %p32 = por %p30, %p31
    %p33 = scmp.ne.s32.totalorder %s22, %s23
    %p34 = scmp.eq.s32.totalorder %s14, 0
    %p35 = por %p33, %p34
    %p36 = scmp.ne.s32.totalorder %s22, %s23
    %p37 = scmp.eq.s32.totalorder %s15, 1
    %p38 = por %p36, %p37
    %p40 = scmp.ne.s32.totalorder %s23, %s39
    %p41 = scmp.eq.s32.totalorder %s15, 0
    %p42 = por %p40, %p41
    %s44 = sadd.s32 %s43, 1
    %p47 = scmp.eq.s32.totalorder %s9, 1
    %p48 = scmp.ne.s32.totalorder %s43, %s45
    %p49 = scmp.eq.s32.totalorder %s9, 0
    %p50 = por %p48, %p49
    %p51 = scmp.ne.s32.totalorder %s43, %s45
    %p52 = scmp.eq.s32.totalorder %s14, 1
    %p53 = por %p51, %p52
    %p54 = scmp.ne.s32.totalorder %s45, %s46
    %p55 = scmp.eq.s32.totalorder %s14, 0
    %p56 = por %p54, %p55
    %p57 = scmp.ne.s32.totalorder %s45, %s46
    %p58 = scmp.eq.s32.totalorder %s15, 1
    %p59 = por %p57, %p58
    %p61 = scmp.ne.s32.totalorder %s46, %s60
    %p62 = scmp.eq.s32.totalorder %s15, 0
    %p63 = por %p61, %p62
    %s65 = sadd.s32 %s64, 1
    %p68 = scmp.eq.s32.totalorder %s9, 1
    %p69 = scmp.ne.s32.totalorder %s64, %s66
    %p70 = scmp.eq.s32.totalorder %s9, 0
    %p71 = por %p69, %p70
    %p72 = scmp.ne.s32.totalorder %s64, %s66
    %p73 = scmp.eq.s32.totalorder %s14, 1
    %p74 = por %p72, %p73
    %p75 = scmp.ne.s32.totalorder %s66, %s67
    %p76 = scmp.eq.s32.totalorder %s14, 0
    %p77 = por %p75, %p76
    %p78 = scmp.ne.s32.totalorder %s66, %s67
    %p79 = scmp.eq.s32.totalorder %s15, 1
    %p80 = por %p78, %p79
    %p82 = scmp.ne.s32.totalorder %s67, %s81
    %p83 = scmp.eq.s32.totalorder %s15, 0
    %p84 = por %p82, %p83
    %s85 = ssub.s32 %s9, %s16
    %p86 = scmp.eq.s32.totalorder %s85, 0
    %s88 = sadd.s32 %s87, 1
    %s89 = scalar_select %p86, %s87, %s88
    %p92 = pneg %p86
    %p93 = scmp.eq.s32.totalorder %s9, 1
    %p94 = por %p92, %p93
    %p95 = scmp.ne.s32.totalorder %s87, %s90
    %p96 = scmp.eq.s32.totalorder %s9, 0
    %p97 = por %p95, %p96
    %p98 = scmp.ne.s32.totalorder %s87, %s90
    %p99 = scmp.eq.s32.totalorder %s14, 1
    %p100 = por %p98, %p99
    %p101 = scmp.ne.s32.totalorder %s90, %s91
    %p102 = scmp.eq.s32.totalorder %s14, 0
    %p103 = por %p101, %p102
    %p104 = scmp.ne.s32.totalorder %s90, %s91
    %p105 = scmp.eq.s32.totalorder %s15, 1
    %p106 = por %p104, %p105
    %p108 = scmp.ne.s32.totalorder %s91, %s107
    %p109 = scmp.eq.s32.totalorder %s15, 0
    %p110 = por %p108, %p109
    %p111 = scmp.le.s32.totalorder 1, %s9
    %p112 = scmp.lt.s32.totalorder %s9, 3
    %p113 = pnand %p111, %p112
    %p114 = pneg %p113
    // Predicated region
    $region9: #{stepwise_vat.2} parent=5 // pred_check
      _
    $region10: #{stepwise_vat.2} parent=5 // pred_check_branch
      %116 = sbr.rel (%p113) target = $region12
    $region11: #{stepwise_vat.2} parent=5 // pred_region
      %s117 = ssub.s32 %s9, 1
      // Predicated region
      $region13: #{stepwise_vat.2} parent=11 // pred_check
        %p118 = pneg %p56
      $region14: #{stepwise_vat.2} parent=11 // pred_check_branch
        %120 = sbr.rel (%p118) target = $region16
      $region15: #{stepwise_vat.2} parent=11 // pred_region
        _
      $region16: #{stepwise_vat.2} parent=11 // pred_fallthru
        _
      // Predicated region
      $region17: #{stepwise_vat.2} parent=11 // pred_check
        %p121 = pneg %p77
      $region18: #{stepwise_vat.2} parent=11 // pred_check_branch
        %123 = sbr.rel (%p121) target = $region20
      $region19: #{stepwise_vat.2} parent=11 // pred_region
        _
      $region20: #{stepwise_vat.2} parent=11 // pred_fallthru
        _
    $region12: #{stepwise_vat.2} parent=5 // pred_fallthru
      _
    %p124 = scmp.lt.s32.totalorder %s9, 2
    // Predicated region
    $region21: #{stepwise_vat.2} parent=5 // pred_check
      %p125 = pneg %p124
    $region22: #{stepwise_vat.2} parent=5 // pred_check_branch
      %127 = sbr.rel (%p125) target = $region24
    $region23: #{stepwise_vat.2} parent=5 // pred_region
      // Predicated region
      $region25: #{stepwise_vat.2} parent=23 // pred_check
        %p128 = pneg %p29
      $region26: #{stepwise_vat.2} parent=23 // pred_check_branch
        %130 = sbr.rel (%p128) target = $region28
      $region27: #{stepwise_vat.2} parent=23 // pred_region
        %s131 = smul.u32 4, %s9
        %p132 = scmp.lt.s32.totalorder %s131, 7
        %s133 = scalar_select %p132, %s131, 7
        %s134 = smul.addr %s133, 8
        %s135 = scalar_lea.vmem %s0, %s134
        %s136 = smul.u32 4, %s9
      $region28: #{stepwise_vat.2} parent=23 // pred_fallthru
        _
    $region24: #{stepwise_vat.2} parent=5 // pred_fallthru
      _
    %p137 = scmp.le.s32.totalorder 1, %s9
    %p138 = scmp.lt.s32.totalorder %s9, 3
    %p139 = pnand %p137, %p138
    %p140 = pneg %p139
    // Predicated region
    $region29: #{stepwise_vat.2} parent=5 // pred_check
      _
    $region30: #{stepwise_vat.2} parent=5 // pred_check_branch
      %142 = sbr.rel (%p139) target = $region32
    $region31: #{stepwise_vat.2} parent=5 // pred_region
      %s143 = ssub.s32 %s9, 1
      %s144 = smul.u32 4, %s14
      %p145 = scmp.lt.s32.totalorder %s144, 7
      %s146 = scalar_select %p145, %s144, 7
      %s147 = smul.addr %s146, 8
      %s148 = scalar_lea.vmem %s0, %s147
      %p149 = pneg %p35
      %p150 = pneg %p32
      %p151 = pneg %p56
      %p152 = pneg %p53
      %p153 = pneg %p77
      %p154 = pneg %p74
      %p155 = pneg %p103
      %p156 = pneg %p100
      %s157 = smul.u32 4, %s14
      %p158 = scmp.lt.s32.totalorder %s157, 7
      %s159 = scalar_select %p158, %s157, 7
      %s160 = smul.addr %s159, 8
      %s161 = scalar_lea.vmem %s3, %s160
      %s162 = smul.u32 4, %s14
      %p163 = scmp.lt.s32.totalorder %s162, 7
      %s164 = scalar_select %p163, %s162, 7
      %s165 = smul.addr %s164, 8
      %s166 = scalar_lea.vmem %s0, %s165
      %s167 = smul.u32 4, %s14
      %s168 = smul.u32 4, %s14
      %p169 = scmp.lt.s32.totalorder %s168, 7
      %s170 = scalar_select %p169, %s168, 7
      %s171 = smul.addr %s170, 8
      %s172 = scalar_lea.vmem %s3, %s171
      %s173 = smul.u32 4, %s14
      %v175 = vld [vmem:[%s166] sm:$0xff]
      %v176 = vld [vmem:[%s166 + $0x8] sm:$0xff]
      %v177 = vld [vmem:[%s166 + $0x10] sm:$0xff]
      %v178 = vld [vmem:[%s166 + $0x18] sm:$0xff]
      %v179 = vpack.c.bf16 %v176, %v175
      %v180 = vpack.c.bf16 %v178, %v177
      %v181 = vld [vmem:[%s1] sm:$0xf]
      %v182 = vld [vmem:[%s1 + $0x4] sm:$0xf]
      %v183 = vld [vmem:[%s1 + $0x8] sm:$0xf]
      %v184 = vld [vmem:[%s1 + $0xc] sm:$0xf]
      %v185 = vld [vmem:[%s1 + $0x10] sm:$0xf]
      %v186 = vld [vmem:[%s1 + $0x14] sm:$0xf]
      %v187 = vld [vmem:[%s1 + $0x18] sm:$0xf]
      %v188 = vld [vmem:[%s1 + $0x1c] sm:$0xf]
      %v189 = vld [vmem:[%s1 + $0x20] sm:$0xf]
      %v190 = vld [vmem:[%s1 + $0x24] sm:$0xf]
      %v191 = vld [vmem:[%s1 + $0x28] sm:$0xf]
      %v192 = vld [vmem:[%s1 + $0x2c] sm:$0xf]
      %v193 = vld [vmem:[%s1 + $0x30] sm:$0xf]
      %v194 = vld [vmem:[%s1 + $0x34] sm:$0xf]
      %v195 = vld [vmem:[%s1 + $0x38] sm:$0xf]
      %v196 = vld [vmem:[%s1 + $0x3c] sm:$0xf]
      %v197 = vld [vmem:[%s2] sm:$0x1]
      %v199 = vlaneseq
      %v200 = vshrl.u32 %v199, 7
      %v201 = vsub.s32 0, %v200
      %v202 = vrot.slane %v197, %v201
      %v220 = vunpack.c.l.b16 %v181
      %v221 = vunpack.c.l.b16 %v182
      %v222 = vunpack.c.l.b16 %v183
      %v223 = vunpack.c.l.b16 %v184
      %v224 = vunpack.c.l.b16 %v185
      %v225 = vunpack.c.l.b16 %v186
      %v226 = vunpack.c.l.b16 %v187
      %v227 = vunpack.c.l.b16 %v188
      %v228 = vunpack.c.l.b16 %v189
      %v229 = vunpack.c.l.b16 %v190
      %v230 = vunpack.c.l.b16 %v191
      %v231 = vunpack.c.l.b16 %v192
      %v232 = vunpack.c.l.b16 %v193
      %v233 = vunpack.c.l.b16 %v194
      %v234 = vunpack.c.l.b16 %v195
      %v235 = vunpack.c.l.b16 %v196
      %v236 = vpack.c.b16 %v221, %v220
      %v237 = vpack.c.b16 %v223, %v222
      %v238 = vpack.c.b16 %v225, %v224
      %v239 = vpack.c.b16 %v227, %v226
      %v240 = vpack.c.b16 %v229, %v228
      %v241 = vpack.c.b16 %v231, %v230
      %v242 = vpack.c.b16 %v233, %v232
      %v243 = vpack.c.b16 %v235, %v234
      %252 = vmatprep.subr.bf16.mxu0 0
      %253 = vmatpush1.bf16.msra.mxu0 %v236
      %254 = vmatprep.subr.bf16.mxu0 0
      %255 = vmatpush1.bf16.msra.mxu0 %v237
      %256 = vmatprep.subr.bf16.mxu0 0
      %257 = vmatpush1.bf16.msra.mxu0 %v238
      %258 = vmatprep.subr.bf16.mxu0 0
      %259 = vmatpush1.bf16.msra.mxu0 %v239
      %260 = vmatprep.subr.bf16.mxu0 0
      %261 = vmatpush1.bf16.msra.mxu0 %v240
      %262 = vmatprep.subr.bf16.mxu0 0
      %263 = vmatpush1.bf16.msra.mxu0 %v241
      %264 = vmatprep.subr.bf16.mxu0 0
      %265 = vmatpush1.bf16.msra.mxu0 %v242
      %266 = vmatprep.subr.bf16.mxu0 0
      %267 = vmatpush1.bf16.msra.mxu0 %v243
      %268 = vmatprep.subr.bf16.mxu0 0
      %269 = vmatpush1.bf16.msra.mxu0 0
      %270 = vmatprep.subr.bf16.mxu0 0
      %271 = vmatpush1.bf16.msra.mxu0 0
      %272 = vmatprep.subr.bf16.mxu0 0
      %273 = vmatpush1.bf16.msra.mxu0 0
      %274 = vmatprep.subr.bf16.mxu0 0
      %275 = vmatpush1.bf16.msra.mxu0 0
      %276 = vmatprep.subr.bf16.mxu0 0
      %277 = vmatpush1.bf16.msra.mxu0 0
      %278 = vmatprep.subr.bf16.mxu0 0
      %279 = vmatpush1.bf16.msra.mxu0 0
      %280 = vmatprep.subr.bf16.mxu0 0
      %281 = vmatpush1.bf16.msra.mxu0 0
      %282 = vmatprep.subr.bf16.mxu0 0
      %283 = vmatpush1.bf16.msra.mxu0 0
      %284 = vmatprep.mubr.bf16.mxu0 0
      %285 = vmatmul.mubr.bf16.gmra.mrb[0].mxu0 %v179
      %v286 = vpop.f32.mrb[0].mxu0
      %v287 = vadd.f32 %v202, %v286
      %v288 = vpop.f32.mrb[0].mxu0
      %v289 = vpop.f32.mrb[0].mxu0
      %v290 = vadd.f32 %v202, %v289
      %v291 = vpop.f32.mrb[0].mxu0
      %292 = vmatprep.mubr.bf16.mxu0 0
      %293 = vmatmul.mubr.bf16.gmra.mrb[0].mxu0 %v180
      %v294 = vpop.f32.mrb[0].mxu0
      %v295 = vadd.f32 %v202, %v294
      %v296 = vpop.f32.mrb[0].mxu0
      %v297 = vpop.f32.mrb[0].mxu0
      %v298 = vadd.f32 %v202, %v297
      %v299 = vpop.f32.mrb[0].mxu0
      %300 = vdwg.mxu0
      %v301 = vxor.u32 %v287, 2147483648
      %v302 = vxor.u32 %v290, 2147483648
      %v303 = vxor.u32 %v295, 2147483648
      %v304 = vxor.u32 %v298, 2147483648
      %v305 = vmul.f32 %v301, 1.442695
      %v306 = vpow.pop %v305
      %v307 = vmul.f32 %v302, 1.442695
      %v308 = vpow.pop %v307
      %v309 = vmul.f32 %v303, 1.442695
      %v310 = vpow.pop %v309
      %v311 = vmul.f32 %v304, 1.442695
      %v312 = vpow.pop %v311
      %v313 = vadd.f32 %v306, 1.0
      %v314 = vadd.f32 %v308, 1.0
      %v315 = vadd.f32 %v310, 1.0
      %v316 = vadd.f32 %v312, 1.0
      %v317 = vrcp.pop %v313
      %v318 = vmul.f32 1.0, %v317
      %v319 = vrcp.pop %v314
      %v320 = vmul.f32 1.0, %v319
      %v321 = vrcp.pop %v315
      %v322 = vmul.f32 1.0, %v321
      %v323 = vrcp.pop %v316
      %v324 = vmul.f32 1.0, %v323
      %325 = vst [vmem:[%s172] sm:$0xff] %v318
      %326 = vst [vmem:[%s172 + $0x8] sm:$0xff] %v320
      %327 = vst [vmem:[%s172 + $0x10] sm:$0xff] %v322
      %328 = vst [vmem:[%s172 + $0x18] sm:$0xff] %v324
      %s329 = smul.u32 4, %s14
      %p330 = scmp.lt.s32.totalorder %s329, 7
      %s331 = scalar_select %p330, %s329, 7
      %s332 = smul.addr %s331, 8
      %s333 = scalar_lea.vmem %s3, %s332
      // Predicated region
      $region33: #{stepwise_vat.2} parent=31 // pred_check
        %p334 = pneg %p100
      $region34: #{stepwise_vat.2} parent=31 // pred_check_branch
        %336 = sbr.rel (%p334) target = $region36
      $region35: #{stepwise_vat.2} parent=31 // pred_region
        %s337 = smul.u32 4, %s14
      $region36: #{stepwise_vat.2} parent=31 // pred_fallthru
        _
    $region32: #{stepwise_vat.2} parent=5 // pred_fallthru
      _
    %p338 = scmp.le.s32.totalorder 2, %s9
    // Predicated region
    $region37: #{stepwise_vat.2} parent=5 // pred_check
      %p339 = pneg %p338
    $region38: #{stepwise_vat.2} parent=5 // pred_check_branch
      %341 = sbr.rel (%p339) target = $region40
    $region39: #{stepwise_vat.2} parent=5 // pred_region
      %s342 = ssub.s32 %s9, 2
      // Predicated region
      $region41: #{stepwise_vat.2} parent=39 // pred_check
        %p343 = pneg %p106
      $region42: #{stepwise_vat.2} parent=39 // pred_check_branch
        %345 = sbr.rel (%p343) target = $region44
      $region43: #{stepwise_vat.2} parent=39 // pred_region
        %s346 = smul.u32 4, %s15
        %p347 = scmp.lt.s32.totalorder %s346, 7
        %s348 = scalar_select %p347, %s346, 7
        %s349 = smul.addr %s348, 8
        %s350 = scalar_lea.vmem %s3, %s349
      $region44: #{stepwise_vat.2} parent=39 // pred_fallthru
        _
    $region40: #{stepwise_vat.2} parent=5 // pred_fallthru
      _
  $region6: #{stepwise_vat.2} parent=0 // loop_footer
    %s13 = sadd.s32 1, %s9
  $region7: #{stepwise_vat.2} parent=0 // loop_footer_branch
    %8 = sbr.rel target = $region3
  $region8: #{stepwise_vat.2} parent=0 // loop_exit
    _

// kernel: jvp__.2
$region0: #{jvp__.2}
  #allocation0 [shape = 'u32[]', space=smem, size = 0x4, offset = 0x4, fixed_abs, tag = 'smem constant byte address 0x4 - core index']
  #allocation1 [shape = 'u32[144,128]{1,0:T(1,128)}', space=vmem, size = 0x12000, scoped, tag = 'internal scratch']
  %s0 = inlined_call_operand.vmem [shape: f32[64,128], index: 0, kind: input, shape index: {}]
  %s1 = inlined_call_operand.vmem [shape: f32[64,128], index: 1, kind: input, shape index: {}]
  %s2 = inlined_call_operand.vmem [shape: bf16[128,128], index: 2, kind: input, shape index: {}]
  %s3 = inlined_call_operand.vmem [shape: f32[1,128], index: 3, kind: input, shape index: {}]
  %s4 = inlined_call_operand.vmem [shape: f32[64,128], index: 4, kind: input, shape index: {}]
  %s5 = inlined_call_operand.hbm [shape: f32[16,128], index: 5, kind: output, shape index: {0}]
  %s6 = inlined_call_operand.vmem [shape: bf16[64,128], index: 6, kind: output, shape index: {1}]
  %7 = xla_tuple %s5, %s6
  %s8 = sld [smem:[#allocation0]]
  $region61: #{jvp__.2} parent=0
    _
  %s10 = ssub.s32 1, %s8
  %s11 = scalar_select 0, %s10, %s8
  $region1: #{jvp__.2} parent=0
    #allocation2 [shape = 'u8[8192]{0}', space=vmem, size = 0x2000, scoped, tag = 'output window, operand 0']
    #allocation3 [shape = 's32[2]{0}', space=sflag, size = 0x8, scoped, tag = 'scoped memory for jvp__.2']
    %12 = vsyncpa [#allocation3], 0
    %s13 = scalar_lea.sflag [#allocation3], 1
    %14 = vsyncpa %s13, 0
    loop: start=0, step=1, limit=4
    $region2: #{jvp__.2} parent=1 // loop_pre_header
      _
    $region3: #{jvp__.2} parent=1 // loop_header
      %s16 = sphi 0, %s20
      %p17 = scmp.ge.s32.totalorder %s16, 4
      %s26 = sphi 0, %s28
      %s29 = sphi 0, %s26
      %s30 = sphi 0, %s29
      %s46 = sphi 0, %s30
      %s52 = sphi 0, %s54
      %s55 = sphi 0, %s52
      %s56 = sphi 0, %s55
      %s72 = sphi 0, %s56
      %s76 = sphi 0, %s76
      %s78 = sphi 0, %s76
      %s79 = sphi 0, %s78
      %s93 = sphi 0, %s79
      %s97 = sphi 0, %s97
      %s99 = sphi 0, %s97
      %s100 = sphi 0, %s99
      %s114 = sphi 0, %s100
      %s120 = sphi 0, %s122
      %s123 = sphi 0, %s120
      %s124 = sphi 0, %s123
      %s140 = sphi 0, %s124
      %s146 = sphi 0, %s148
      %s149 = sphi 0, %s146
      %s150 = sphi 0, %s149
      %s166 = sphi 0, %s150
      %s172 = sphi 0, %s174
      %s175 = sphi 0, %s172
      %s176 = sphi 0, %s175
      %s192 = sphi 0, %s176
    $region4: #{jvp__.2} parent=1 // loop_header_branch
      %19 = sbr.rel (%p17) target = $region8
    $region5: #{jvp__.2} parent=1 // loop_body
      %s21 = ssub.s32 %s16, 1
      %s22 = ssub.s32 %s16, 2
      %s23 = sadd.s32 %s16, 1
      %s24 = ssub.s32 %s16, %s23
      %p25 = scmp.eq.s32.totalorder %s24, 0
      %s27 = sadd.s32 %s26, 1
      %s28 = scalar_select %p25, %s26, %s27
      %p31 = pneg %p25
      %p32 = scmp.eq.s32.totalorder %s16, 1
      %p33 = por %p31, %p32
      %p34 = scmp.ne.s32.totalorder %s26, %s29
      %p35 = scmp.eq.s32.totalorder %s16, 0
      %p36 = por %p34, %p35
      %p37 = scmp.ne.s32.totalorder %s26, %s29
      %p38 = scmp.eq.s32.totalorder %s21, 1
      %p39 = por %p37, %p38
      %p40 = scmp.ne.s32.totalorder %s29, %s30
      %p41 = scmp.eq.s32.totalorder %s21, 0
      %p42 = por %p40, %p41
      %p43 = scmp.ne.s32.totalorder %s29, %s30
      %p44 = scmp.eq.s32.totalorder %s22, 1
      %p45 = por %p43, %p44
      %p47 = scmp.ne.s32.totalorder %s30, %s46
      %p48 = scmp.eq.s32.totalorder %s22, 0
      %p49 = por %p47, %p48
      %s50 = ssub.s32 %s16, %s23
      %p51 = scmp.eq.s32.totalorder %s50, 0
      %s53 = sadd.s32 %s52, 1
      %s54 = scalar_select %p51, %s52, %s53
      %p57 = pneg %p51
      %p58 = scmp.eq.s32.totalorder %s16, 1
      %p59 = por %p57, %p58
      %p60 = scmp.ne.s32.totalorder %s52, %s55
      %p61 = scmp.eq.s32.totalorder %s16, 0
      %p62 = por %p60, %p61
      %p63 = scmp.ne.s32.totalorder %s52, %s55
      %p64 = scmp.eq.s32.totalorder %s21, 1
      %p65 = por %p63, %p64
      %p66 = scmp.ne.s32.totalorder %s55, %s56
      %p67 = scmp.eq.s32.totalorder %s21, 0
      %p68 = por %p66, %p67
      %p69 = scmp.ne.s32.totalorder %s55, %s56
      %p70 = scmp.eq.s32.totalorder %s22, 1
      %p71 = por %p69, %p70
      %p73 = scmp.ne.s32.totalorder %s56, %s72
      %p74 = scmp.eq.s32.totalorder %s22, 0
      %p75 = por %p73, %p74
      %s77 = sadd.s32 %s76, 1
      %p80 = scmp.eq.s32.totalorder %s16, 1
      %p81 = scmp.ne.s32.totalorder %s76, %s78
      %p82 = scmp.eq.s32.totalorder %s16, 0
      %p83 = por %p81, %p82
      %p84 = scmp.ne.s32.totalorder %s76, %s78
      %p85 = scmp.eq.s32.totalorder %s21, 1
      %p86 = por %p84, %p85
      %p87 = scmp.ne.s32.totalorder %s78, %s79
      %p88 = scmp.eq.s32.totalorder %s21, 0
      %p89 = por %p87, %p88
      %p90 = scmp.ne.s32.totalorder %s78, %s79
      %p91 = scmp.eq.s32.totalorder %s22, 1
      %p92 = por %p90, %p91
      %p94 = scmp.ne.s32.totalorder %s79, %s93
      %p95 = scmp.eq.s32.totalorder %s22, 0
      %p96 = por %p94, %p95
      %s98 = sadd.s32 %s97, 1
      %p101 = scmp.eq.s32.totalorder %s16, 1
      %p102 = scmp.ne.s32.totalorder %s97, %s99
      %p103 = scmp.eq.s32.totalorder %s16, 0
      %p104 = por %p102, %p103
      %p105 = scmp.ne.s32.totalorder %s97, %s99
      %p106 = scmp.eq.s32.totalorder %s21, 1
      %p107 = por %p105, %p106
      %p108 = scmp.ne.s32.totalorder %s99, %s100
      %p109 = scmp.eq.s32.totalorder %s21, 0
      %p110 = por %p108, %p109
      %p111 = scmp.ne.s32.totalorder %s99, %s100
      %p112 = scmp.eq.s32.totalorder %s22, 1
      %p113 = por %p111, %p112
      %p115 = scmp.ne.s32.totalorder %s100, %s114
      %p116 = scmp.eq.s32.totalorder %s22, 0
      %p117 = por %p115, %p116
      %s118 = ssub.s32 %s16, %s23
      %p119 = scmp.eq.s32.totalorder %s118, 0
      %s121 = sadd.s32 %s120, 1
      %s122 = scalar_select %p119, %s120, %s121
      %p125 = pneg %p119
      %p126 = scmp.eq.s32.totalorder %s16, 1
      %p127 = por %p125, %p126
      %p128 = scmp.ne.s32.totalorder %s120, %s123
      %p129 = scmp.eq.s32.totalorder %s16, 0
      %p130 = por %p128, %p129
      %p131 = scmp.ne.s32.totalorder %s120, %s123
      %p132 = scmp.eq.s32.totalorder %s21, 1
      %p133 = por %p131, %p132
      %p134 = scmp.ne.s32.totalorder %s123, %s124
      %p135 = scmp.eq.s32.totalorder %s21, 0
      %p136 = por %p134, %p135
      %p137 = scmp.ne.s32.totalorder %s123, %s124
      %p138 = scmp.eq.s32.totalorder %s22, 1
      %p139 = por %p137, %p138
      %p141 = scmp.ne.s32.totalorder %s124, %s140
      %p142 = scmp.eq.s32.totalorder %s22, 0
      %p143 = por %p141, %p142
      %s144 = ssub.s32 %s16, %s23
      %p145 = scmp.eq.s32.totalorder %s144, 0
      %s147 = sadd.s32 %s146, 1
      %s148 = scalar_select %p145, %s146, %s147
      %p151 = pneg %p145
      %p152 = scmp.eq.s32.totalorder %s16, 1
      %p153 = por %p151, %p152
      %p154 = scmp.ne.s32.totalorder %s146, %s149
      %p155 = scmp.eq.s32.totalorder %s16, 0
      %p156 = por %p154, %p155
      %p157 = scmp.ne.s32.totalorder %s146, %s149
      %p158 = scmp.eq.s32.totalorder %s21, 1
      %p159 = por %p157, %p158
      %p160 = scmp.ne.s32.totalorder %s149, %s150
      %p161 = scmp.eq.s32.totalorder %s21, 0
      %p162 = por %p160, %p161
      %p163 = scmp.ne.s32.totalorder %s149, %s150
      %p164 = scmp.eq.s32.totalorder %s22, 1
      %p165 = por %p163, %p164
      %p167 = scmp.ne.s32.totalorder %s150, %s166
      %p168 = scmp.eq.s32.totalorder %s22, 0
      %p169 = por %p167, %p168
      %s170 = ssub.s32 %s16, %s23
      %p171 = scmp.eq.s32.totalorder %s170, 0
      %s173 = sadd.s32 %s172, 1
      %s174 = scalar_select %p171, %s172, %s173
      %p177 = pneg %p171
      %p178 = scmp.eq.s32.totalorder %s16, 1
      %p179 = por %p177, %p178
      %p180 = scmp.ne.s32.totalorder %s172, %s175
      %p181 = scmp.eq.s32.totalorder %s16, 0
      %p182 = por %p180, %p181
      %p183 = scmp.ne.s32.totalorder %s172, %s175
      %p184 = scmp.eq.s32.totalorder %s21, 1
      %p185 = por %p183, %p184
      %p186 = scmp.ne.s32.totalorder %s175, %s176
      %p187 = scmp.eq.s32.totalorder %s21, 0
      %p188 = por %p186, %p187
      %p189 = scmp.ne.s32.totalorder %s175, %s176
      %p190 = scmp.eq.s32.totalorder %s22, 1
      %p191 = por %p189, %p190
      %p193 = scmp.ne.s32.totalorder %s176, %s192
      %p194 = scmp.eq.s32.totalorder %s22, 0
      %p195 = por %p193, %p194
      %p196 = scmp.le.s32.totalorder 1, %s16
      %p197 = scmp.lt.s32.totalorder %s16, 3
      %p198 = pnand %p196, %p197
      %p199 = pneg %p198
      // Predicated region
      $region9: #{jvp__.2} parent=5 // pred_check
        _
      $region10: #{jvp__.2} parent=5 // pred_check_branch
        %201 = sbr.rel (%p198) target = $region12
      $region11: #{jvp__.2} parent=5 // pred_region
        %s202 = ssub.s32 %s16, 1
        // Predicated region
        $region13: #{jvp__.2} parent=11 // pred_check
          %p203 = pneg %p89
        $region14: #{jvp__.2} parent=11 // pred_check_branch
          %205 = sbr.rel (%p203) target = $region16
        $region15: #{jvp__.2} parent=11 // pred_region
          _
        $region16: #{jvp__.2} parent=11 // pred_fallthru
          _
        // Predicated region
        $region17: #{jvp__.2} parent=11 // pred_check
          %p206 = pneg %p110
        $region18: #{jvp__.2} parent=11 // pred_check_branch
          %208 = sbr.rel (%p206) target = $region20
        $region19: #{jvp__.2} parent=11 // pred_region
          _
        $region20: #{jvp__.2} parent=11 // pred_fallthru
          _
      $region12: #{jvp__.2} parent=5 // pred_fallthru
        _
      %p209 = scmp.lt.s32.totalorder %s16, 2
      // Predicated region
      $region21: #{jvp__.2} parent=5 // pred_check
        %p210 = pneg %p209
      $region22: #{jvp__.2} parent=5 // pred_check_branch
        %212 = sbr.rel (%p210) target = $region24
      $region23: #{jvp__.2} parent=5 // pred_region
        // Predicated region
        $region25: #{jvp__.2} parent=23 // pred_check
          %p213 = pneg %p36
        $region26: #{jvp__.2} parent=23 // pred_check_branch
          %215 = sbr.rel (%p213) target = $region28
        $region27: #{jvp__.2} parent=23 // pred_region
          %s216 = smul.u32 4, %s16
          %p217 = scmp.lt.s32.totalorder %s216, 7
          %s218 = scalar_select %p217, %s216, 7
          %s219 = smul.addr %s218, 8
          %s220 = scalar_lea.vmem %s0, %s219
          %s221 = smul.u32 4, %s16
        $region28: #{jvp__.2} parent=23 // pred_fallthru
          _
        // Predicated region
        $region29: #{jvp__.2} parent=23 // pred_check
          %p222 = pneg %p62
        $region30: #{jvp__.2} parent=23 // pred_check_branch
          %224 = sbr.rel (%p222) target = $region32
        $region31: #{jvp__.2} parent=23 // pred_region
          %s225 = smul.u32 4, %s16
          %p226 = scmp.lt.s32.totalorder %s225, 7
          %s227 = scalar_select %p226, %s225, 7
          %s228 = smul.addr %s227, 8
          %s229 = scalar_lea.vmem %s1, %s228
          %s230 = smul.u32 4, %s16
        $region32: #{jvp__.2} parent=23 // pred_fallthru
          _
        // Predicated region
        $region33: #{jvp__.2} parent=23 // pred_check
          %p231 = pneg %p130
        $region34: #{jvp__.2} parent=23 // pred_check_branch
          %233 = sbr.rel (%p231) target = $region36
        $region35: #{jvp__.2} parent=23 // pred_region
          %s234 = smul.u32 4, %s16
          %p235 = scmp.lt.s32.totalorder %s234, 7
          %s236 = scalar_select %p235, %s234, 7
          %s237 = smul.addr %s236, 8
          %s238 = scalar_lea.vmem %s4, %s237
          %s239 = smul.u32 4, %s16
        $region36: #{jvp__.2} parent=23 // pred_fallthru
          _
      $region24: #{jvp__.2} parent=5 // pred_fallthru
        _
      %p240 = scmp.le.s32.totalorder 1, %s16
      %p241 = scmp.lt.s32.totalorder %s16, 3
      %p242 = pnand %p240, %p241
      %p243 = pneg %p242
      // Predicated region
      $region37: #{jvp__.2} parent=5 // pred_check
        _
      $region38: #{jvp__.2} parent=5 // pred_check_branch
        %245 = sbr.rel (%p242) target = $region40
      $region39: #{jvp__.2} parent=5 // pred_region
        %s246 = ssub.s32 %s16, 1
        %s247 = smul.u32 4, %s21
        %p248 = scmp.lt.s32.totalorder %s247, 7
        %s249 = scalar_select %p248, %s247, 7
        %s250 = smul.addr %s249, 8
        %s251 = scalar_lea.vmem %s0, %s250
        %p252 = pneg %p42
        %p253 = pneg %p39
        %s254 = smul.u32 4, %s21
        %p255 = scmp.lt.s32.totalorder %s254, 7
        %s256 = scalar_select %p255, %s254, 7
        %s257 = smul.addr %s256, 8
        %s258 = scalar_lea.vmem %s1, %s257
        %p259 = pneg %p68
        %p260 = pneg %p65
        %p261 = pneg %p89
        %p262 = pneg %p86
        %p263 = pneg %p110
        %p264 = pneg %p107
        %s265 = smul.u32 4, %s21
        %p266 = scmp.lt.s32.totalorder %s265, 7
        %s267 = scalar_select %p266, %s265, 7
        %s268 = smul.addr %s267, 8
        %s269 = scalar_lea.vmem %s4, %s268
        %p270 = pneg %p136
        %p271 = pneg %p133
        %p272 = pneg %p162
        %p273 = pneg %p159
        %s274 = sand.u32 %s149, 1
        %s275 = scalar_lea.sflag [#allocation3], %s274
        %s276 = sand.u32 %s149, 1
        %s277 = smul.addr %s276, 8
        %s278 = scalar_lea.vmem [#allocation2], %s277
        %p279 = pneg %p188
        %p280 = pneg %p185
        %s281 = smul.u32 4, %s21
        %p282 = scmp.lt.s32.totalorder %s281, 7
        %s283 = scalar_select %p282, %s281, 7
        %s284 = smul.addr %s283, 4
        %s285 = scalar_lea.vmem %s6, %s284
        %s286 = smul.u32 4, %s21
        %p287 = scmp.lt.s32.totalorder %s286, 7
        %s288 = scalar_select %p287, %s286, 7
        %s289 = smul.addr %s288, 8
        %s290 = scalar_lea.vmem %s0, %s289
        %s291 = smul.u32 4, %s21
        %s292 = smul.u32 4, %s21
        %p293 = scmp.lt.s32.totalorder %s292, 7
        %s294 = scalar_select %p293, %s292, 7
        %s295 = smul.addr %s294, 8
        %s296 = scalar_lea.vmem %s1, %s295
        %s297 = smul.u32 4, %s21
        %s298 = smul.u32 4, %s21
        %p299 = scmp.lt.s32.totalorder %s298, 7
        %s300 = scalar_select %p299, %s298, 7
        %s301 = smul.addr %s300, 8
        %s302 = scalar_lea.vmem %s4, %s301
        %s303 = smul.u32 4, %s21
        %s304 = smul.u32 4, %s21
        %p305 = scmp.lt.s32.totalorder %s304, 7
        %s306 = scalar_select %p305, %s304, 7
        %s307 = smul.addr %s306, 4
        %s308 = scalar_lea.vmem %s6, %s307
        %s309 = smul.u32 4, %s21
        %v311 = vld [vmem:[%s296] sm:$0xff]
        %v312 = vld [vmem:[%s296 + $0x8] sm:$0xff]
        %v313 = vld [vmem:[%s296 + $0x10] sm:$0xff]
        %v314 = vld [vmem:[%s296 + $0x18] sm:$0xff]
        %v315 = vmul.f32 %v311, %v311
        %v316 = vmul.f32 %v312, %v312
        %v317 = vmul.f32 %v313, %v313
        %v318 = vmul.f32 %v314, %v314
        %319 = vadd.xlane.f32.xlu0 %v315
        %v320 = vpop.xlane.xlu0 %319
        %321 = vadd.xlane.f32.xlu0 %v316
        %v322 = vpop.xlane.xlu0 %321
        %323 = vadd.xlane.f32.xlu0 %v317
        %v324 = vpop.xlane.xlu0 %323
        %325 = vadd.xlane.f32.xlu0 %v318
        %v326 = vpop.xlane.xlu0 %325
        %v327 = vmax.f32 %v320, 1e-30
        %v328 = vmax.f32 %v322, 1e-30
        %v329 = vmax.f32 %v324, 1e-30
        %v330 = vmax.f32 %v326, 1e-30
        %v331 = vrsqrt.pop %v327
        %v332 = vrsqrt.pop %v328
        %v333 = vrsqrt.pop %v329
        %v334 = vrsqrt.pop %v330
        %v335 = vld [vmem:[%s290] sm:$0xff]
        %v336 = vld [vmem:[%s290 + $0x8] sm:$0xff]
        %v337 = vld [vmem:[%s290 + $0x10] sm:$0xff]
        %v338 = vld [vmem:[%s290 + $0x18] sm:$0xff]
        %v339 = vmul.f32 %v331, 1e-05
        %v340 = vmul.f32 %v332, 1e-05
        %v341 = vmul.f32 %v333, 1e-05
        %v342 = vmul.f32 %v334, 1e-05
        %v343 = vmul.f32 %v339, %v311
        %v344 = vmul.f32 %v340, %v312
        %v345 = vmul.f32 %v341, %v313
        %v346 = vmul.f32 %v342, %v314
        %v347 = vadd.f32 %v335, %v343
        %v348 = vadd.f32 %v336, %v344
        %v349 = vadd.f32 %v337, %v345
        %v350 = vadd.f32 %v338, %v346
        %v351 = vmax.f32 %v347, 0.0
        %v352 = vmax.f32 %v348, 0.0
        %v353 = vmax.f32 %v349, 0.0
        %v354 = vmax.f32 %v350, 0.0
        %v355 = vmin.f32 %v351, 1.0
        %v356 = vmin.f32 %v352, 1.0
        %v357 = vmin.f32 %v353, 1.0
        %v358 = vmin.f32 %v354, 1.0
        %v359 = vpack.c.bf16 %v356, %v355
        %v360 = vpack.c.bf16 %v358, %v357
        %v361 = vld [vmem:[%s2] sm:$0xf]
        %v362 = vld [vmem:[%s2 + $0x4] sm:$0xf]
        %v363 = vld [vmem:[%s2 + $0x8] sm:$0xf]
        %v364 = vld [vmem:[%s2 + $0xc] sm:$0xf]
        %v365 = vld [vmem:[%s2 + $0x10] sm:$0xf]
        %v366 = vld [vmem:[%s2 + $0x14] sm:$0xf]
        %v367 = vld [vmem:[%s2 + $0x18] sm:$0xf]
        %v368 = vld [vmem:[%s2 + $0x1c] sm:$0xf]
        %v369 = vld [vmem:[%s2 + $0x20] sm:$0xf]
        %v370 = vld [vmem:[%s2 + $0x24] sm:$0xf]
        %v371 = vld [vmem:[%s2 + $0x28] sm:$0xf]
        %v372 = vld [vmem:[%s2 + $0x2c] sm:$0xf]
        %v373 = vld [vmem:[%s2 + $0x30] sm:$0xf]
        %v374 = vld [vmem:[%s2 + $0x34] sm:$0xf]
        %v375 = vld [vmem:[%s2 + $0x38] sm:$0xf]
        %v376 = vld [vmem:[%s2 + $0x3c] sm:$0xf]
        %v377 = vld [vmem:[%s3] sm:$0x1]
        %v379 = vlaneseq
        %v380 = vshrl.u32 %v379, 7
        %v381 = vsub.s32 0, %v380
        %v382 = vrot.slane %v377, %v381
        %v400 = vunpack.c.l.b16 %v361
        %v401 = vunpack.c.l.b16 %v362
        %v402 = vunpack.c.l.b16 %v363
        %v403 = vunpack.c.l.b16 %v364
        %v404 = vunpack.c.l.b16 %v365
        %v405 = vunpack.c.l.b16 %v366
        %v406 = vunpack.c.l.b16 %v367
        %v407 = vunpack.c.l.b16 %v368
        %v408 = vunpack.c.l.b16 %v369
        %v409 = vunpack.c.l.b16 %v370
        %v410 = vunpack.c.l.b16 %v371
        %v411 = vunpack.c.l.b16 %v372
        %v412 = vunpack.c.l.b16 %v373
        %v413 = vunpack.c.l.b16 %v374
        %v414 = vunpack.c.l.b16 %v375
        %v415 = vunpack.c.l.b16 %v376
        %v416 = vpack.c.b16 %v401, %v400
        %v417 = vpack.c.b16 %v403, %v402
        %v418 = vpack.c.b16 %v405, %v404
        %v419 = vpack.c.b16 %v407, %v406
        %v420 = vpack.c.b16 %v409, %v408
        %v421 = vpack.c.b16 %v411, %v410
        %v422 = vpack.c.b16 %v413, %v412
        %v423 = vpack.c.b16 %v415, %v414
        %432 = vmatprep.subr.bf16.mxu0 0
        %433 = vmatpush1.bf16.msra.mxu0 %v416
        %434 = vmatprep.subr.bf16.mxu0 0
        %435 = vmatpush1.bf16.msra.mxu0 %v417
        %436 = vmatprep.subr.bf16.mxu0 0
        %437 = vmatpush1.bf16.msra.mxu0 %v418
        %438 = vmatprep.subr.bf16.mxu0 0
        %439 = vmatpush1.bf16.msra.mxu0 %v419
        %440 = vmatprep.subr.bf16.mxu0 0
        %441 = vmatpush1.bf16.msra.mxu0 %v420
        %442 = vmatprep.subr.bf16.mxu0 0
        %443 = vmatpush1.bf16.msra.mxu0 %v421
        %444 = vmatprep.subr.bf16.mxu0 0
        %445 = vmatpush1.bf16.msra.mxu0 %v422
        %446 = vmatprep.subr.bf16.mxu0 0
        %447 = vmatpush1.bf16.msra.mxu0 %v423
        %448 = vmatprep.subr.bf16.mxu0 0
        %449 = vmatpush1.bf16.msra.mxu0 0
        %450 = vmatprep.subr.bf16.mxu0 0
        %451 = vmatpush1.bf16.msra.mxu0 0
        %452 = vmatprep.subr.bf16.mxu0 0
        %453 = vmatpush1.bf16.msra.mxu0 0
        %454 = vmatprep.subr.bf16.mxu0 0
        %455 = vmatpush1.bf16.msra.mxu0 0
        %456 = vmatprep.subr.bf16.mxu0 0
        %457 = vmatpush1.bf16.msra.mxu0 0
        %458 = vmatprep.subr.bf16.mxu0 0
        %459 = vmatpush1.bf16.msra.mxu0 0
        %460 = vmatprep.subr.bf16.mxu0 0
        %461 = vmatpush1.bf16.msra.mxu0 0
        %462 = vmatprep.subr.bf16.mxu0 0
        %463 = vmatpush1.bf16.msra.mxu0 0
        %464 = vmatprep.mubr.bf16.mxu0 0
        %465 = vmatmul.mubr.bf16.gmra.mrb[0].mxu0 %v359
        %v466 = vpop.f32.mrb[0].mxu0
        %v467 = vadd.f32 %v382, %v466
        %v468 = vpop.f32.mrb[0].mxu0
        %v469 = vpop.f32.mrb[0].mxu0
        %v470 = vadd.f32 %v382, %v469
        %v471 = vpop.f32.mrb[0].mxu0
        %472 = vmatprep.mubr.bf16.mxu0 0
        %473 = vmatmul.mubr.bf16.gmra.mrb[0].mxu0 %v360
        %v474 = vpop.f32.mrb[0].mxu0
        %v475 = vadd.f32 %v382, %v474
        %v476 = vpop.f32.mrb[0].mxu0
        %v477 = vpop.f32.mrb[0].mxu0
        %v478 = vadd.f32 %v382, %v477
        %v479 = vpop.f32.mrb[0].mxu0
        %480 = vdwg.mxu0
        %v481 = vld [vmem:[%s302] sm:$0xff]
        %v482 = vld [vmem:[%s302 + $0x8] sm:$0xff]
        %v483 = vld [vmem:[%s302 + $0x10] sm:$0xff]
        %v484 = vld [vmem:[%s302 + $0x18] sm:$0xff]
        %v485 = vsub.f32 0.0, %v467
        %v486 = vsub.f32 0.0, %v470
        %v487 = vsub.f32 0.0, %v475
        %v488 = vsub.f32 0.0, %v478
        %v489 = vmax.f32 %v485, 0.0
        %v490 = vmax.f32 %v486, 0.0
        %v491 = vmax.f32 %v487, 0.0
        %v492 = vmax.f32 %v488, 0.0
        %v493 = vand.u32 2147483647, %v467
        %v494 = vand.u32 2147483647, %v470
        %v495 = vand.u32 2147483647, %v475
        %v496 = vand.u32 2147483647, %v478
        %v497 = vsub.f32 0.0, %v493
        %v498 = vsub.f32 0.0, %v494
        %v499 = vsub.f32 0.0, %v495
        %v500 = vsub.f32 0.0, %v496
        %v501 = vmul.f32 %v497, 1.442695
        %v502 = vpow.pop %v501
        %v503 = vmul.f32 %v498, 1.442695
        %v504 = vpow.pop %v503
        %v505 = vmul.f32 %v499, 1.442695
        %v506 = vpow.pop %v505
        %v507 = vmul.f32 %v500, 1.442695
        %v508 = vpow.pop %v507
        %v509 = vadd.f32 %v502, 1.0
        %v510 = vadd.f32 %v504, 1.0
        %v511 = vadd.f32 %v506, 1.0
        %v512 = vadd.f32 %v508, 1.0
        %v513 = vlog2.pop %v509
        %v514 = vmul.f32 %v513, 0.6931472
        %v515 = vlog2.pop %v510
        %v516 = vmul.f32 %v515, 0.6931472
        %v517 = vlog2.pop %v511
        %v518 = vmul.f32 %v517, 0.6931472
        %v519 = vlog2.pop %v512
        %v520 = vmul.f32 %v519, 0.6931472
        %v521 = vadd.f32 %v489, %v514
        %v522 = vadd.f32 %v490, %v516
        %v523 = vadd.f32 %v491, %v518
        %v524 = vadd.f32 %v492, %v520
        %v525 = vsub.f32 0.0, %v521
        %v526 = vsub.f32 0.0, %v522
        %v527 = vsub.f32 0.0, %v523
        %v528 = vsub.f32 0.0, %v524
        %v529 = vmul.f32 %v525, 1.442695
        %v530 = vpow.pop %v529
        %v531 = vmul.f32 %v526, 1.442695
        %v532 = vpow.pop %v531
        %v533 = vmul.f32 %v527, 1.442695
        %v534 = vpow.pop %v533
        %v535 = vmul.f32 %v528, 1.442695
        %v536 = vpow.pop %v535
        %v537 = vmax.f32 %v525, -100.0
        %v538 = vmax.f32 %v526, -100.0
        %v539 = vmax.f32 %v527, -100.0
        %v540 = vmax.f32 %v528, -100.0
        %v541 = vsub.f32 %v525, %v467
        %v542 = vsub.f32 %v526, %v470
        %v543 = vsub.f32 %v527, %v475
        %v544 = vsub.f32 %v528, %v478
        %v545 = vmax.f32 %v541, -100.0
        %v546 = vmax.f32 %v542, -100.0
        %v547 = vmax.f32 %v543, -100.0
        %v548 = vmax.f32 %v544, -100.0
        %v549 = vmul.f32 %v481, %v537
        %v550 = vmul.f32 %v482, %v538
        %v551 = vmul.f32 %v483, %v539
        %v552 = vmul.f32 %v484, %v540
        %v553 = vsub.f32 1.0, %v481
        %v554 = vsub.f32 1.0, %v482
        %v555 = vsub.f32 1.0, %v483
        %v556 = vsub.f32 1.0, %v484
        %v557 = vmul.f32 %v553, %v545
        %v558 = vmul.f32 %v554, %v546
        %v559 = vmul.f32 %v555, %v547
        %v560 = vmul.f32 %v556, %v548
        %v561 = vadd.f32 %v549, %v557
        %v562 = vadd.f32 %v550, %v558
        %v563 = vadd.f32 %v551, %v559
        %v564 = vadd.f32 %v552, %v560
        %v565 = vsub.f32 0.0, %v561
        %v566 = vsub.f32 0.0, %v562
        %v567 = vsub.f32 0.0, %v563
        %v568 = vsub.f32 0.0, %v564
        %v569 = vpack.c.bf16 %v532, %v530
        %v570 = vpack.c.bf16 %v536, %v534
        %v573 = vunpack.c.l.b16 %v569
        %v574 = vunpack.c.h.b16 %v569
        %v575 = vunpack.c.l.b16 %v570
        %v576 = vunpack.c.h.b16 %v570
        %v577 = vpack.c.b16 %v573, %v573
        %v578 = vpack.c.b16 %v574, %v574
        %v579 = vpack.c.b16 %v575, %v575
        %v580 = vpack.c.b16 %v576, %v576
        %585 = vst [vmem:[%s308] sm:$0xf] %v577
        %586 = vst [vmem:[%s308 + $0x4] sm:$0xf] %v578
        %587 = vst [vmem:[%s308 + $0x8] sm:$0xf] %v579
        %588 = vst [vmem:[%s308 + $0xc] sm:$0xf] %v580
        %v589 = vadd.f32 %v565, %v566
        %v590 = vadd.f32 %v589, %v567
        %v591 = vadd.f32 %v590, %v568
        %592 = vadd.xlane.f32.xlu0 %v591
        %v593 = vpop.xlane.xlu0 %592
        %v594 = vrot.slane %v593, 4
        %v595 = vadd.f32 %v593, %v594
        %v596 = vrot.slane %v595, 2
        %v597 = vadd.f32 %v595, %v596
        %v598 = vrot.slane %v597, 1
        %v599 = vadd.f32 %v597, %v598
        %s600 = vtos %v599
        %s601 = smul.f32 %s600, 0.00012207031
        %v602 = vstv %s601
        %v603 = vadd.f32 %v602, 0.0
        %604 = vst [vmem:[%s278] sm:$0xff] %v603
        %s605 = sand.u32 %s149, 1
        %s606 = scalar_lea.sflag [#allocation3], %s605
        %s607 = sand.u32 %s149, 1
        %s608 = smul.addr %s607, 8
        %s609 = scalar_lea.vmem [#allocation2], %s608
        %s610 = smul.u32 4, %s21
        %p611 = scmp.lt.s32.totalorder %s610, 7
        %s612 = scalar_select %p611, %s610, 7
        %s613 = smul.addr %s612, 4
        %s614 = scalar_lea.vmem %s6, %s613
        // Predicated region
        $region41: #{jvp__.2} parent=39 // pred_check
          %p615 = pneg %p159
        $region42: #{jvp__.2} parent=39 // pred_check_branch
          %617 = sbr.rel (%p615) target = $region44
        $region43: #{jvp__.2} parent=39 // pred_region
          %s619 = ssub.s32 128, 128
          %620 = vsyncadd %s606, %s619
          %s621 = smul.addr %s21, 128
          %s622 = scalar_lea.hbm %s5, %s621
          %s624 = sshll.u32 %s609, 4
          %s625 = int_to_ptr.vmem [resolvable:$true] %s624
          %627 = dma.vmem_to_hbm [thread:$0]  %s625, 128, %s622, %s606
        $region44: #{jvp__.2} parent=39 // pred_fallthru
          _
        // Predicated region
        $region45: #{jvp__.2} parent=39 // pred_check
          %p628 = pneg %p185
        $region46: #{jvp__.2} parent=39 // pred_check_branch
          %630 = sbr.rel (%p628) target = $region48
        $region47: #{jvp__.2} parent=39 // pred_region
          %s631 = smul.u32 4, %s21
        $region48: #{jvp__.2} parent=39 // pred_fallthru
          _
      $region40: #{jvp__.2} parent=5 // pred_fallthru
        _
      %p632 = scmp.le.s32.totalorder 2, %s16
      // Predicated region
      $region49: #{jvp__.2} parent=5 // pred_check
        %p633 = pneg %p632
      $region50: #{jvp__.2} parent=5 // pred_check_branch
        %635 = sbr.rel (%p633) target = $region52
      $region51: #{jvp__.2} parent=5 // pred_region
        %s636 = ssub.s32 %s16, 2
        // Predicated region
        $region53: #{jvp__.2} parent=51 // pred_check
          %p637 = pneg %p165
        $region54: #{jvp__.2} parent=51 // pred_check_branch
          %639 = sbr.rel (%p637) target = $region56
        $region55: #{jvp__.2} parent=51 // pred_region
          %s640 = sand.u32 %s150, 1
          %s641 = scalar_lea.sflag [#allocation3], %s640
          %s642 = sand.u32 %s150, 1
          %s643 = smul.addr %s642, 8
          %s644 = scalar_lea.vmem [#allocation2], %s643
          %645 = dma.done %s641, 128
        $region56: #{jvp__.2} parent=51 // pred_fallthru
          _
        // Predicated region
        $region57: #{jvp__.2} parent=51 // pred_check
          %p646 = pneg %p191
        $region58: #{jvp__.2} parent=51 // pred_check_branch
          %648 = sbr.rel (%p646) target = $region60
        $region59: #{jvp__.2} parent=51 // pred_region
          %s649 = smul.u32 4, %s22
          %p650 = scmp.lt.s32.totalorder %s649, 7
          %s651 = scalar_select %p650, %s649, 7
          %s652 = smul.addr %s651, 4
          %s653 = scalar_lea.vmem %s6, %s652
        $region60: #{jvp__.2} parent=51 // pred_fallthru
          _
      $region52: #{jvp__.2} parent=5 // pred_fallthru
        _
    $region6: #{jvp__.2} parent=1 // loop_footer
      %s20 = sadd.s32 1, %s16
    $region7: #{jvp__.2} parent=1 // loop_footer_branch
      %15 = sbr.rel target = $region3
    $region8: #{jvp__.2} parent=1 // loop_exit
      _
    %654 = vsyncpa [#allocation3], 1
    %s655 = scalar_lea.sflag [#allocation3], 1
    %656 = vsyncpa %s655, 1

// kernel: stepwise_vat.3
$region0: #{stepwise_vat.3}
  #allocation0 [shape = 'u32[]', space=smem, size = 0x4, offset = 0x4, fixed_abs, tag = 'smem constant byte address 0x4 - core index']
  #allocation1 [shape = 'u32[144,128]{1,0:T(1,128)}', space=vmem, size = 0x12000, scoped, tag = 'internal scratch']
  %s0 = inlined_call_operand.vmem [shape: f32[64,128], index: 0, kind: input, shape index: {}]
  %s1 = inlined_call_operand.vmem [shape: f32[64,128], index: 1, kind: input, shape index: {}]
  %s2 = inlined_call_operand.vmem [shape: bf16[128,128], index: 2, kind: input, shape index: {}]
  %s3 = inlined_call_operand.vmem [shape: f32[1,128], index: 3, kind: input, shape index: {}]
  %s4 = inlined_call_operand.vmem [shape: f32[64,128], index: 4, kind: input, shape index: {}]
  %s5 = inlined_call_operand.hbm [shape: f32[64,128], index: 5, kind: output, shape index: {0}]
  %s6 = inlined_call_operand.hbm [shape: f32[64,128], index: 6, kind: output, shape index: {1}]
  %s7 = inlined_call_operand.vmem [shape: f32[16,128], index: 7, kind: output, shape index: {2}]
  %8 = xla_tuple %s5, %s6, %s7
  %s9 = sld [smem:[#allocation0]]
  $region69: #{stepwise_vat.3} parent=0
    _
  %s11 = ssub.s32 1, %s9
  %s12 = scalar_select 0, %s11, %s9
  $region1: #{stepwise_vat.3} parent=0
    #allocation2 [shape = 'u8[32768]{0}', space=vmem, size = 0x8000, scoped, tag = 'output window, operand 0']
    #allocation3 [shape = 's32[2]{0}', space=sflag, size = 0x8, scoped, tag = 'scoped memory for stepwise_vat.3']
    #allocation4 [shape = 'u8[32768]{0}', space=vmem, size = 0x8000, scoped, tag = 'output window, operand 1']
    #allocation5 [shape = 's32[2]{0}', space=sflag, size = 0x8, scoped, tag = 'scoped memory for stepwise_vat.3']
    %13 = vsyncpa [#allocation3], 0
    %s14 = scalar_lea.sflag [#allocation3], 1
    %15 = vsyncpa %s14, 0
    %16 = vsyncpa [#allocation5], 0
    %s17 = scalar_lea.sflag [#allocation5], 1
    %18 = vsyncpa %s17, 0
    loop: start=0, step=1, limit=4
    $region2: #{stepwise_vat.3} parent=1 // loop_pre_header
      _
    $region3: #{stepwise_vat.3} parent=1 // loop_header
      %s20 = sphi 0, %s24
      %p21 = scmp.ge.s32.totalorder %s20, 4
      %s30 = sphi 0, %s32
      %s33 = sphi 0, %s30
      %s34 = sphi 0, %s33
      %s50 = sphi 0, %s34
      %s56 = sphi 0, %s58
      %s59 = sphi 0, %s56
      %s60 = sphi 0, %s59
      %s76 = sphi 0, %s60
      %s80 = sphi 0, %s80
      %s82 = sphi 0, %s80
      %s83 = sphi 0, %s82
      %s97 = sphi 0, %s83
      %s101 = sphi 0, %s101
      %s103 = sphi 0, %s101
      %s104 = sphi 0, %s103
      %s118 = sphi 0, %s104
      %s124 = sphi 0, %s126
      %s127 = sphi 0, %s124
      %s128 = sphi 0, %s127
      %s144 = sphi 0, %s128
      %s150 = sphi 0, %s152
      %s153 = sphi 0, %s150
      %s154 = sphi 0, %s153
      %s170 = sphi 0, %s154
      %s176 = sphi 0, %s178
      %s179 = sphi 0, %s176
      %s180 = sphi 0, %s179
      %s196 = sphi 0, %s180
      %s202 = sphi 0, %s204
      %s205 = sphi 0, %s202
      %s206 = sphi 0, %s205
      %s222 = sphi 0, %s206
    $region4: #{stepwise_vat.3} parent=1 // loop_header_branch
      %23 = sbr.rel (%p21) target = $region8
    $region5: #{stepwise_vat.3} parent=1 // loop_body
      %s25 = ssub.s32 %s20, 1
      %s26 = ssub.s32 %s20, 2
      %s27 = sadd.s32 %s20, 1
      %s28 = ssub.s32 %s20, %s27
      %p29 = scmp.eq.s32.totalorder %s28, 0
      %s31 = sadd.s32 %s30, 1
      %s32 = scalar_select %p29, %s30, %s31
      %p35 = pneg %p29
      %p36 = scmp.eq.s32.totalorder %s20, 1
      %p37 = por %p35, %p36
      %p38 = scmp.ne.s32.totalorder %s30, %s33
      %p39 = scmp.eq.s32.totalorder %s20, 0
      %p40 = por %p38, %p39
      %p41 = scmp.ne.s32.totalorder %s30, %s33
      %p42 = scmp.eq.s32.totalorder %s25, 1
      %p43 = por %p41, %p42
      %p44 = scmp.ne.s32.totalorder %s33, %s34
      %p45 = scmp.eq.s32.totalorder %s25, 0
      %p46 = por %p44, %p45
      %p47 = scmp.ne.s32.totalorder %s33, %s34
      %p48 = scmp.eq.s32.totalorder %s26, 1
      %p49 = por %p47, %p48
      %p51 = scmp.ne.s32.totalorder %s34, %s50
      %p52 = scmp.eq.s32.totalorder %s26, 0
      %p53 = por %p51, %p52
      %s54 = ssub.s32 %s20, %s27
      %p55 = scmp.eq.s32.totalorder %s54, 0
      %s57 = sadd.s32 %s56, 1
      %s58 = scalar_select %p55, %s56, %s57
      %p61 = pneg %p55
      %p62 = scmp.eq.s32.totalorder %s20, 1
      %p63 = por %p61, %p62
      %p64 = scmp.ne.s32.totalorder %s56, %s59
      %p65 = scmp.eq.s32.totalorder %s20, 0
      %p66 = por %p64, %p65
      %p67 = scmp.ne.s32.totalorder %s56, %s59
      %p68 = scmp.eq.s32.totalorder %s25, 1
      %p69 = por %p67, %p68
      %p70 = scmp.ne.s32.totalorder %s59, %s60
      %p71 = scmp.eq.s32.totalorder %s25, 0
      %p72 = por %p70, %p71
      %p73 = scmp.ne.s32.totalorder %s59, %s60
      %p74 = scmp.eq.s32.totalorder %s26, 1
      %p75 = por %p73, %p74
      %p77 = scmp.ne.s32.totalorder %s60, %s76
      %p78 = scmp.eq.s32.totalorder %s26, 0
      %p79 = por %p77, %p78
      %s81 = sadd.s32 %s80, 1
      %p84 = scmp.eq.s32.totalorder %s20, 1
      %p85 = scmp.ne.s32.totalorder %s80, %s82
      %p86 = scmp.eq.s32.totalorder %s20, 0
      %p87 = por %p85, %p86
      %p88 = scmp.ne.s32.totalorder %s80, %s82
      %p89 = scmp.eq.s32.totalorder %s25, 1
      %p90 = por %p88, %p89
      %p91 = scmp.ne.s32.totalorder %s82, %s83
      %p92 = scmp.eq.s32.totalorder %s25, 0
      %p93 = por %p91, %p92
      %p94 = scmp.ne.s32.totalorder %s82, %s83
      %p95 = scmp.eq.s32.totalorder %s26, 1
      %p96 = por %p94, %p95
      %p98 = scmp.ne.s32.totalorder %s83, %s97
      %p99 = scmp.eq.s32.totalorder %s26, 0
      %p100 = por %p98, %p99
      %s102 = sadd.s32 %s101, 1
      %p105 = scmp.eq.s32.totalorder %s20, 1
      %p106 = scmp.ne.s32.totalorder %s101, %s103
      %p107 = scmp.eq.s32.totalorder %s20, 0
      %p108 = por %p106, %p107
      %p109 = scmp.ne.s32.totalorder %s101, %s103
      %p110 = scmp.eq.s32.totalorder %s25, 1
      %p111 = por %p109, %p110
      %p112 = scmp.ne.s32.totalorder %s103, %s104
      %p113 = scmp.eq.s32.totalorder %s25, 0
      %p114 = por %p112, %p113
      %p115 = scmp.ne.s32.totalorder %s103, %s104
      %p116 = scmp.eq.s32.totalorder %s26, 1
      %p117 = por %p115, %p116
      %p119 = scmp.ne.s32.totalorder %s104, %s118
      %p120 = scmp.eq.s32.totalorder %s26, 0
      %p121 = por %p119, %p120
      %s122 = ssub.s32 %s20, %s27
      %p123 = scmp.eq.s32.totalorder %s122, 0
      %s125 = sadd.s32 %s124, 1
      %s126 = scalar_select %p123, %s124, %s125
      %p129 = pneg %p123
      %p130 = scmp.eq.s32.totalorder %s20, 1
      %p131 = por %p129, %p130
      %p132 = scmp.ne.s32.totalorder %s124, %s127
      %p133 = scmp.eq.s32.totalorder %s20, 0
      %p134 = por %p132, %p133
      %p135 = scmp.ne.s32.totalorder %s124, %s127
      %p136 = scmp.eq.s32.totalorder %s25, 1
      %p137 = por %p135, %p136
      %p138 = scmp.ne.s32.totalorder %s127, %s128
      %p139 = scmp.eq.s32.totalorder %s25, 0
      %p140 = por %p138, %p139
      %p141 = scmp.ne.s32.totalorder %s127, %s128
      %p142 = scmp.eq.s32.totalorder %s26, 1
      %p143 = por %p141, %p142
      %p145 = scmp.ne.s32.totalorder %s128, %s144
      %p146 = scmp.eq.s32.totalorder %s26, 0
      %p147 = por %p145, %p146
      %s148 = ssub.s32 %s20, %s27
      %p149 = scmp.eq.s32.totalorder %s148, 0
      %s151 = sadd.s32 %s150, 1
      %s152 = scalar_select %p149, %s150, %s151
      %p155 = pneg %p149
      %p156 = scmp.eq.s32.totalorder %s20, 1
      %p157 = por %p155, %p156
      %p158 = scmp.ne.s32.totalorder %s150, %s153
      %p159 = scmp.eq.s32.totalorder %s20, 0
      %p160 = por %p158, %p159
      %p161 = scmp.ne.s32.totalorder %s150, %s153
      %p162 = scmp.eq.s32.totalorder %s25, 1
      %p163 = por %p161, %p162
      %p164 = scmp.ne.s32.totalorder %s153, %s154
      %p165 = scmp.eq.s32.totalorder %s25, 0
      %p166 = por %p164, %p165
      %p167 = scmp.ne.s32.totalorder %s153, %s154
      %p168 = scmp.eq.s32.totalorder %s26, 1
      %p169 = por %p167, %p168
      %p171 = scmp.ne.s32.totalorder %s154, %s170
      %p172 = scmp.eq.s32.totalorder %s26, 0
      %p173 = por %p171, %p172
      %s174 = ssub.s32 %s20, %s27
      %p175 = scmp.eq.s32.totalorder %s174, 0
      %s177 = sadd.s32 %s176, 1
      %s178 = scalar_select %p175, %s176, %s177
      %p181 = pneg %p175
      %p182 = scmp.eq.s32.totalorder %s20, 1
      %p183 = por %p181, %p182
      %p184 = scmp.ne.s32.totalorder %s176, %s179
      %p185 = scmp.eq.s32.totalorder %s20, 0
      %p186 = por %p184, %p185
      %p187 = scmp.ne.s32.totalorder %s176, %s179
      %p188 = scmp.eq.s32.totalorder %s25, 1
      %p189 = por %p187, %p188
      %p190 = scmp.ne.s32.totalorder %s179, %s180
      %p191 = scmp.eq.s32.totalorder %s25, 0
      %p192 = por %p190, %p191
      %p193 = scmp.ne.s32.totalorder %s179, %s180
      %p194 = scmp.eq.s32.totalorder %s26, 1
      %p195 = por %p193, %p194
      %p197 = scmp.ne.s32.totalorder %s180, %s196
      %p198 = scmp.eq.s32.totalorder %s26, 0
      %p199 = por %p197, %p198
      %s200 = ssub.s32 %s20, %s27
      %p201 = scmp.eq.s32.totalorder %s200, 0
      %s203 = sadd.s32 %s202, 1
      %s204 = scalar_select %p201, %s202, %s203
      %p207 = pneg %p201
      %p208 = scmp.eq.s32.totalorder %s20, 1
      %p209 = por %p207, %p208
      %p210 = scmp.ne.s32.totalorder %s202, %s205
      %p211 = scmp.eq.s32.totalorder %s20, 0
      %p212 = por %p210, %p211
      %p213 = scmp.ne.s32.totalorder %s202, %s205
      %p214 = scmp.eq.s32.totalorder %s25, 1
      %p215 = por %p213, %p214
      %p216 = scmp.ne.s32.totalorder %s205, %s206
      %p217 = scmp.eq.s32.totalorder %s25, 0
      %p218 = por %p216, %p217
      %p219 = scmp.ne.s32.totalorder %s205, %s206
      %p220 = scmp.eq.s32.totalorder %s26, 1
      %p221 = por %p219, %p220
      %p223 = scmp.ne.s32.totalorder %s206, %s222
      %p224 = scmp.eq.s32.totalorder %s26, 0
      %p225 = por %p223, %p224
      %p226 = scmp.le.s32.totalorder 1, %s20
      %p227 = scmp.lt.s32.totalorder %s20, 3
      %p228 = pnand %p226, %p227
      %p229 = pneg %p228
      // Predicated region
      $region9: #{stepwise_vat.3} parent=5 // pred_check
        _
      $region10: #{stepwise_vat.3} parent=5 // pred_check_branch
        %231 = sbr.rel (%p228) target = $region12
      $region11: #{stepwise_vat.3} parent=5 // pred_region
        %s232 = ssub.s32 %s20, 1
        // Predicated region
        $region13: #{stepwise_vat.3} parent=11 // pred_check
          %p233 = pneg %p93
        $region14: #{stepwise_vat.3} parent=11 // pred_check_branch
          %235 = sbr.rel (%p233) target = $region16
        $region15: #{stepwise_vat.3} parent=11 // pred_region
          _
        $region16: #{stepwise_vat.3} parent=11 // pred_fallthru
          _
        // Predicated region
        $region17: #{stepwise_vat.3} parent=11 // pred_check
          %p236 = pneg %p114
        $region18: #{stepwise_vat.3} parent=11 // pred_check_branch
          %238 = sbr.rel (%p236) target = $region20
        $region19: #{stepwise_vat.3} parent=11 // pred_region
          _
        $region20: #{stepwise_vat.3} parent=11 // pred_fallthru
          _
      $region12: #{stepwise_vat.3} parent=5 // pred_fallthru
        _
      %p239 = scmp.lt.s32.totalorder %s20, 2
      // Predicated region
      $region21: #{stepwise_vat.3} parent=5 // pred_check
        %p240 = pneg %p239
      $region22: #{stepwise_vat.3} parent=5 // pred_check_branch
        %242 = sbr.rel (%p240) target = $region24
      $region23: #{stepwise_vat.3} parent=5 // pred_region
        // Predicated region
        $region25: #{stepwise_vat.3} parent=23 // pred_check
          %p243 = pneg %p40
        $region26: #{stepwise_vat.3} parent=23 // pred_check_branch
          %245 = sbr.rel (%p243) target = $region28
        $region27: #{stepwise_vat.3} parent=23 // pred_region
          %s246 = smul.u32 4, %s20
          %p247 = scmp.lt.s32.totalorder %s246, 7
          %s248 = scalar_select %p247, %s246, 7
          %s249 = smul.addr %s248, 8
          %s250 = scalar_lea.vmem %s0, %s249
          %s251 = smul.u32 4, %s20
        $region28: #{stepwise_vat.3} parent=23 // pred_fallthru
          _
        // Predicated region
        $region29: #{stepwise_vat.3} parent=23 // pred_check
          %p252 = pneg %p66
        $region30: #{stepwise_vat.3} parent=23 // pred_check_branch
          %254 = sbr.rel (%p252) target = $region32
        $region31: #{stepwise_vat.3} parent=23 // pred_region
          %s255 = smul.u32 4, %s20
          %p256 = scmp.lt.s32.totalorder %s255, 7
          %s257 = scalar_select %p256, %s255, 7
          %s258 = smul.addr %s257, 8
          %s259 = scalar_lea.vmem %s1, %s258
          %s260 = smul.u32 4, %s20
        $region32: #{stepwise_vat.3} parent=23 // pred_fallthru
          _
        // Predicated region
        $region33: #{stepwise_vat.3} parent=23 // pred_check
          %p261 = pneg %p134
        $region34: #{stepwise_vat.3} parent=23 // pred_check_branch
          %263 = sbr.rel (%p261) target = $region36
        $region35: #{stepwise_vat.3} parent=23 // pred_region
          %s264 = smul.u32 4, %s20
          %p265 = scmp.lt.s32.totalorder %s264, 7
          %s266 = scalar_select %p265, %s264, 7
          %s267 = smul.addr %s266, 8
          %s268 = scalar_lea.vmem %s4, %s267
          %s269 = smul.u32 4, %s20
        $region36: #{stepwise_vat.3} parent=23 // pred_fallthru
          _
      $region24: #{stepwise_vat.3} parent=5 // pred_fallthru
        _
      %p270 = scmp.le.s32.totalorder 1, %s20
      %p271 = scmp.lt.s32.totalorder %s20, 3
      %p272 = pnand %p270, %p271
      %p273 = pneg %p272
      // Predicated region
      $region37: #{stepwise_vat.3} parent=5 // pred_check
        _
      $region38: #{stepwise_vat.3} parent=5 // pred_check_branch
        %275 = sbr.rel (%p272) target = $region40
      $region39: #{stepwise_vat.3} parent=5 // pred_region
        %s276 = ssub.s32 %s20, 1
        %s277 = smul.u32 4, %s25
        %p278 = scmp.lt.s32.totalorder %s277, 7
        %s279 = scalar_select %p278, %s277, 7
        %s280 = smul.addr %s279, 8
        %s281 = scalar_lea.vmem %s0, %s280
        %p282 = pneg %p46
        %p283 = pneg %p43
        %s284 = smul.u32 4, %s25
        %p285 = scmp.lt.s32.totalorder %s284, 7
        %s286 = scalar_select %p285, %s284, 7
        %s287 = smul.addr %s286, 8
        %s288 = scalar_lea.vmem %s1, %s287
        %p289 = pneg %p72
        %p290 = pneg %p69
        %p291 = pneg %p93
        %p292 = pneg %p90
        %p293 = pneg %p114
        %p294 = pneg %p111
        %s295 = smul.u32 4, %s25
        %p296 = scmp.lt.s32.totalorder %s295, 7
        %s297 = scalar_select %p296, %s295, 7
        %s298 = smul.addr %s297, 8
        %s299 = scalar_lea.vmem %s4, %s298
        %p300 = pneg %p140
        %p301 = pneg %p137
        %p302 = pneg %p166
        %p303 = pneg %p163
        %s304 = sand.u32 %s153, 1
        %s305 = scalar_lea.sflag [#allocation3], %s304
        %s306 = sand.u32 %s153, 1
        %s307 = smul.addr %s306, 32
        %s308 = scalar_lea.vmem [#allocation2], %s307
        %p309 = pneg %p192
        %p310 = pneg %p189
        %s311 = sand.u32 %s179, 1
        %s312 = scalar_lea.sflag [#allocation5], %s311
        %s313 = sand.u32 %s179, 1
        %s314 = smul.addr %s313, 32
        %s315 = scalar_lea.vmem [#allocation4], %s314
        %p316 = pneg %p218
        %p317 = pneg %p215
        %p318 = scmp.lt.s32.totalorder %s25, 1
        %s319 = scalar_select %p318, %s25, 1
        %s320 = smul.addr %s319, 8
        %s321 = scalar_lea.vmem %s7, %s320
        %s322 = smul.u32 4, %s25
        %p323 = scmp.lt.s32.totalorder %s322, 7
        %s324 = scalar_select %p323, %s322, 7
        %s325 = smul.addr %s324, 8
        %s326 = scalar_lea.vmem %s0, %s325
        %s327 = smul.u32 4, %s25
        %s328 = smul.u32 4, %s25
        %p329 = scmp.lt.s32.totalorder %s328, 7
        %s330 = scalar_select %p329, %s328, 7
        %s331 = smul.addr %s330, 8
        %s332 = scalar_lea.vmem %s1, %s331
        %s333 = smul.u32 4, %s25
        %s334 = smul.u32 4, %s25
        %p335 = scmp.lt.s32.totalorder %s334, 7
        %s336 = scalar_select %p335, %s334, 7
        %s337 = smul.addr %s336, 8
        %s338 = scalar_lea.vmem %s4, %s337
        %s339 = smul.u32 4, %s25
        %s340 = smul.u32 4, %s25
        %s341 = smul.u32 4, %s25
        %p342 = scmp.lt.s32.totalorder %s25, 1
        %s343 = scalar_select %p342, %s25, 1
        %s344 = smul.addr %s343, 8
        %s345 = scalar_lea.vmem %s7, %s344
        %v347 = vld [vmem:[%s332] sm:$0xff]
        %v348 = vld [vmem:[%s332 + $0x8] sm:$0xff]
        %v349 = vld [vmem:[%s332 + $0x10] sm:$0xff]
        %v350 = vld [vmem:[%s332 + $0x18] sm:$0xff]
        %v351 = vmul.f32 %v347, %v347
        %v352 = vmul.f32 %v348, %v348
        %v353 = vmul.f32 %v349, %v349
        %v354 = vmul.f32 %v350, %v350
        %355 = vadd.xlane.f32.xlu0 %v351
        %v356 = vpop.xlane.xlu0 %355
        %357 = vadd.xlane.f32.xlu0 %v352
        %v358 = vpop.xlane.xlu0 %357
        %359 = vadd.xlane.f32.xlu0 %v353
        %v360 = vpop.xlane.xlu0 %359
        %361 = vadd.xlane.f32.xlu0 %v354
        %v362 = vpop.xlane.xlu0 %361
        %v363 = vmax.f32 %v356, 1e-30
        %v364 = vmax.f32 %v358, 1e-30
        %v365 = vmax.f32 %v360, 1e-30
        %v366 = vmax.f32 %v362, 1e-30
        %v367 = vrsqrt.pop %v363
        %v368 = vrsqrt.pop %v364
        %v369 = vrsqrt.pop %v365
        %v370 = vrsqrt.pop %v366
        %v371 = vmul.f32 %v347, %v367
        %v372 = vmul.f32 %v348, %v368
        %v373 = vmul.f32 %v349, %v369
        %v374 = vmul.f32 %v350, %v370
        %v375 = vmul.f32 %v371, 10.0
        %v376 = vmul.f32 %v372, 10.0
        %v377 = vmul.f32 %v373, 10.0
        %v378 = vmul.f32 %v374, 10.0
        %379 = vst [vmem:[%s315] sm:$0xff] %v371
        %380 = vst [vmem:[%s315 + $0x8] sm:$0xff] %v372
        %381 = vst [vmem:[%s315 + $0x10] sm:$0xff] %v373
        %382 = vst [vmem:[%s315 + $0x18] sm:$0xff] %v374
        %383 = vst [vmem:[%s308] sm:$0xff] %v375
        %384 = vst [vmem:[%s308 + $0x8] sm:$0xff] %v376
        %385 = vst [vmem:[%s308 + $0x10] sm:$0xff] %v377
        %386 = vst [vmem:[%s308 + $0x18] sm:$0xff] %v378
        %v387 = vld [vmem:[%s326] sm:$0xff]
        %v388 = vld [vmem:[%s326 + $0x8] sm:$0xff]
        %v389 = vld [vmem:[%s326 + $0x10] sm:$0xff]
        %v390 = vld [vmem:[%s326 + $0x18] sm:$0xff]
        %v391 = vadd.f32 %v387, %v375
        %v392 = vadd.f32 %v388, %v376
        %v393 = vadd.f32 %v389, %v377
        %v394 = vadd.f32 %v390, %v378
        %v395 = vmax.f32 %v391, 0.0
        %v396 = vmax.f32 %v392, 0.0
        %v397 = vmax.f32 %v393, 0.0
        %v398 = vmax.f32 %v394, 0.0
        %v399 = vmin.f32 %v395, 1.0
        %v400 = vmin.f32 %v396, 1.0
        %v401 = vmin.f32 %v397, 1.0
        %v402 = vmin.f32 %v398, 1.0
        %v403 = vpack.c.bf16 %v400, %v399
        %v404 = vpack.c.bf16 %v402, %v401
        %v405 = vld [vmem:[%s2] sm:$0xf]
        %v406 = vld [vmem:[%s2 + $0x4] sm:$0xf]
        %v407 = vld [vmem:[%s2 + $0x8] sm:$0xf]
        %v408 = vld [vmem:[%s2 + $0xc] sm:$0xf]
        %v409 = vld [vmem:[%s2 + $0x10] sm:$0xf]
        %v410 = vld [vmem:[%s2 + $0x14] sm:$0xf]
        %v411 = vld [vmem:[%s2 + $0x18] sm:$0xf]
        %v412 = vld [vmem:[%s2 + $0x1c] sm:$0xf]
        %v413 = vld [vmem:[%s2 + $0x20] sm:$0xf]
        %v414 = vld [vmem:[%s2 + $0x24] sm:$0xf]
        %v415 = vld [vmem:[%s2 + $0x28] sm:$0xf]
        %v416 = vld [vmem:[%s2 + $0x2c] sm:$0xf]
        %v417 = vld [vmem:[%s2 + $0x30] sm:$0xf]
        %v418 = vld [vmem:[%s2 + $0x34] sm:$0xf]
        %v419 = vld [vmem:[%s2 + $0x38] sm:$0xf]
        %v420 = vld [vmem:[%s2 + $0x3c] sm:$0xf]
        %v421 = vld [vmem:[%s3] sm:$0x1]
        %v423 = vlaneseq
        %v424 = vshrl.u32 %v423, 7
        %v425 = vsub.s32 0, %v424
        %v426 = vrot.slane %v421, %v425
        %v444 = vunpack.c.l.b16 %v405
        %v445 = vunpack.c.l.b16 %v406
        %v446 = vunpack.c.l.b16 %v407
        %v447 = vunpack.c.l.b16 %v408
        %v448 = vunpack.c.l.b16 %v409
        %v449 = vunpack.c.l.b16 %v410
        %v450 = vunpack.c.l.b16 %v411
        %v451 = vunpack.c.l.b16 %v412
        %v452 = vunpack.c.l.b16 %v413
        %v453 = vunpack.c.l.b16 %v414
        %v454 = vunpack.c.l.b16 %v415
        %v455 = vunpack.c.l.b16 %v416
        %v456 = vunpack.c.l.b16 %v417
        %v457 = vunpack.c.l.b16 %v418
        %v458 = vunpack.c.l.b16 %v419
        %v459 = vunpack.c.l.b16 %v420
        %v460 = vpack.c.b16 %v445, %v444
        %v461 = vpack.c.b16 %v447, %v446
        %v462 = vpack.c.b16 %v449, %v448
        %v463 = vpack.c.b16 %v451, %v450
        %v464 = vpack.c.b16 %v453, %v452
        %v465 = vpack.c.b16 %v455, %v454
        %v466 = vpack.c.b16 %v457, %v456
        %v467 = vpack.c.b16 %v459, %v458
        %476 = vmatprep.subr.bf16.mxu0 0
        %477 = vmatpush1.bf16.msra.mxu0 %v460
        %478 = vmatprep.subr.bf16.mxu0 0
        %479 = vmatpush1.bf16.msra.mxu0 %v461
        %480 = vmatprep.subr.bf16.mxu0 0
        %481 = vmatpush1.bf16.msra.mxu0 %v462
        %482 = vmatprep.subr.bf16.mxu0 0
        %483 = vmatpush1.bf16.msra.mxu0 %v463
        %484 = vmatprep.subr.bf16.mxu0 0
        %485 = vmatpush1.bf16.msra.mxu0 %v464
        %486 = vmatprep.subr.bf16.mxu0 0
        %487 = vmatpush1.bf16.msra.mxu0 %v465
        %488 = vmatprep.subr.bf16.mxu0 0
        %489 = vmatpush1.bf16.msra.mxu0 %v466
        %490 = vmatprep.subr.bf16.mxu0 0
        %491 = vmatpush1.bf16.msra.mxu0 %v467
        %492 = vmatprep.subr.bf16.mxu0 0
        %493 = vmatpush1.bf16.msra.mxu0 0
        %494 = vmatprep.subr.bf16.mxu0 0
        %495 = vmatpush1.bf16.msra.mxu0 0
        %496 = vmatprep.subr.bf16.mxu0 0
        %497 = vmatpush1.bf16.msra.mxu0 0
        %498 = vmatprep.subr.bf16.mxu0 0
        %499 = vmatpush1.bf16.msra.mxu0 0
        %500 = vmatprep.subr.bf16.mxu0 0
        %501 = vmatpush1.bf16.msra.mxu0 0
        %502 = vmatprep.subr.bf16.mxu0 0
        %503 = vmatpush1.bf16.msra.mxu0 0
        %504 = vmatprep.subr.bf16.mxu0 0
        %505 = vmatpush1.bf16.msra.mxu0 0
        %506 = vmatprep.subr.bf16.mxu0 0
        %507 = vmatpush1.bf16.msra.mxu0 0
        %508 = vmatprep.mubr.bf16.mxu0 0
        %509 = vmatmul.mubr.bf16.gmra.mrb[0].mxu0 %v403
        %v510 = vpop.f32.mrb[0].mxu0
        %v511 = vadd.f32 %v426, %v510
        %v512 = vpop.f32.mrb[0].mxu0
        %v513 = vpop.f32.mrb[0].mxu0
        %v514 = vadd.f32 %v426, %v513
        %v515 = vpop.f32.mrb[0].mxu0
        %516 = vmatprep.mubr.bf16.mxu0 0
        %517 = vmatmul.mubr.bf16.gmra.mrb[0].mxu0 %v404
        %v518 = vpop.f32.mrb[0].mxu0
        %v519 = vadd.f32 %v426, %v518
        %v520 = vpop.f32.mrb[0].mxu0
        %v521 = vpop.f32.mrb[0].mxu0
        %v522 = vadd.f32 %v426, %v521
        %v523 = vpop.f32.mrb[0].mxu0
        %524 = vdwg.mxu0
        %v525 = vld [vmem:[%s338] sm:$0xff]
        %v526 = vld [vmem:[%s338 + $0x8] sm:$0xff]
        %v527 = vld [vmem:[%s338 + $0x10] sm:$0xff]
        %v528 = vld [vmem:[%s338 + $0x18] sm:$0xff]
        %v529 = vsub.f32 0.0, %v511
        %v530 = vsub.f32 0.0, %v514
        %v531 = vsub.f32 0.0, %v519
        %v532 = vsub.f32 0.0, %v522
        %v533 = vmax.f32 %v529, 0.0
        %v534 = vmax.f32 %v530, 0.0
        %v535 = vmax.f32 %v531, 0.0
        %v536 = vmax.f32 %v532, 0.0
        %v537 = vand.u32 2147483647, %v511
        %v538 = vand.u32 2147483647, %v514
        %v539 = vand.u32 2147483647, %v519
        %v540 = vand.u32 2147483647, %v522
        %v541 = vsub.f32 0.0, %v537
        %v542 = vsub.f32 0.0, %v538
        %v543 = vsub.f32 0.0, %v539
        %v544 = vsub.f32 0.0, %v540
        %v545 = vmul.f32 %v541, 1.442695
        %v546 = vpow.pop %v545
        %v547 = vmul.f32 %v542, 1.442695
        %v548 = vpow.pop %v547
        %v549 = vmul.f32 %v543, 1.442695
        %v550 = vpow.pop %v549
        %v551 = vmul.f32 %v544, 1.442695
        %v552 = vpow.pop %v551
        %v553 = vadd.f32 %v546, 1.0
        %v554 = vadd.f32 %v548, 1.0
        %v555 = vadd.f32 %v550, 1.0
        %v556 = vadd.f32 %v552, 1.0
        %v557 = vlog2.pop %v553
        %v558 = vmul.f32 %v557, 0.6931472
        %v559 = vlog2.pop %v554
        %v560 = vmul.f32 %v559, 0.6931472
        %v561 = vlog2.pop %v555
        %v562 = vmul.f32 %v561, 0.6931472
        %v563 = vlog2.pop %v556
        %v564 = vmul.f32 %v563, 0.6931472
        %v565 = vadd.f32 %v533, %v558
        %v566 = vadd.f32 %v534, %v560
        %v567 = vadd.f32 %v535, %v562
        %v568 = vadd.f32 %v536, %v564
        %v569 = vsub.f32 0.0, %v565
        %v570 = vsub.f32 0.0, %v566
        %v571 = vsub.f32 0.0, %v567
        %v572 = vsub.f32 0.0, %v568
        %v573 = vmax.f32 %v569, -100.0
        %v574 = vmax.f32 %v570, -100.0
        %v575 = vmax.f32 %v571, -100.0
        %v576 = vmax.f32 %v572, -100.0
        %v577 = vsub.f32 %v569, %v511
        %v578 = vsub.f32 %v570, %v514
        %v579 = vsub.f32 %v571, %v519
        %v580 = vsub.f32 %v572, %v522
        %v581 = vmax.f32 %v577, -100.0
        %v582 = vmax.f32 %v578, -100.0
        %v583 = vmax.f32 %v579, -100.0
        %v584 = vmax.f32 %v580, -100.0
        %v585 = vmul.f32 %v525, %v573
        %v586 = vmul.f32 %v526, %v574
        %v587 = vmul.f32 %v527, %v575
        %v588 = vmul.f32 %v528, %v576
        %v589 = vsub.f32 1.0, %v525
        %v590 = vsub.f32 1.0, %v526
        %v591 = vsub.f32 1.0, %v527
        %v592 = vsub.f32 1.0, %v528
        %v593 = vmul.f32 %v589, %v581
        %v594 = vmul.f32 %v590, %v582
        %v595 = vmul.f32 %v591, %v583
        %v596 = vmul.f32 %v592, %v584
        %v597 = vadd.f32 %v585, %v593
        %v598 = vadd.f32 %v586, %v594
        %v599 = vadd.f32 %v587, %v595
        %v600 = vadd.f32 %v588, %v596
        %v601 = vsub.f32 0.0, %v597
        %v602 = vsub.f32 0.0, %v598
        %v603 = vsub.f32 0.0, %v599
        %v604 = vsub.f32 0.0, %v600
        %v605 = vadd.f32 %v601, %v602
        %v606 = vadd.f32 %v605, %v603
        %v607 = vadd.f32 %v606, %v604
        %608 = vadd.xlane.f32.xlu0 %v607
        %v609 = vpop.xlane.xlu0 %608
        %v610 = vrot.slane %v609, 4
        %v611 = vadd.f32 %v609, %v610
        %v612 = vrot.slane %v611, 2
        %v613 = vadd.f32 %v611, %v612
        %v614 = vrot.slane %v613, 1
        %v615 = vadd.f32 %v613, %v614
        %s616 = vtos %v615
        %s617 = smul.f32 %s616, 0.00012207031
        %v618 = vstv %s617
        %v619 = vadd.f32 %v618, 0.0
        %620 = vst [vmem:[%s345] sm:$0xff] %v619
        %s621 = sand.u32 %s153, 1
        %s622 = scalar_lea.sflag [#allocation3], %s621
        %s623 = sand.u32 %s153, 1
        %s624 = smul.addr %s623, 32
        %s625 = scalar_lea.vmem [#allocation2], %s624
        %s626 = sand.u32 %s179, 1
        %s627 = scalar_lea.sflag [#allocation5], %s626
        %s628 = sand.u32 %s179, 1
        %s629 = smul.addr %s628, 32
        %s630 = scalar_lea.vmem [#allocation4], %s629
        %p631 = scmp.lt.s32.totalorder %s25, 1
        %s632 = scalar_select %p631, %s25, 1
        %s633 = smul.addr %s632, 8
        %s634 = scalar_lea.vmem %s7, %s633
        // Predicated region
        $region41: #{stepwise_vat.3} parent=39 // pred_check
          %p635 = pneg %p163
        $region42: #{stepwise_vat.3} parent=39 // pred_check_branch
          %637 = sbr.rel (%p635) target = $region44
        $region43: #{stepwise_vat.3} parent=39 // pred_region
          %s638 = smul.u32 4, %s25
          %s640 = ssub.s32 512, 512
          %641 = vsyncadd %s622, %s640
          %s642 = smul.addr %s638, 128
          %s643 = scalar_lea.hbm %s5, %s642
          %s644 = sshll.u32 %s625, 4
          %s645 = int_to_ptr.vmem [resolvable:$true] %s644
          %650 = dma.vmem_to_hbm [thread:$0]  %s645, 512, %s643, %s622, 128, 128, 8
        $region44: #{stepwise_vat.3} parent=39 // pred_fallthru
          _
        // Predicated region
        $region45: #{stepwise_vat.3} parent=39 // pred_check
          %p651 = pneg %p189
        $region46: #{stepwise_vat.3} parent=39 // pred_check_branch
          %653 = sbr.rel (%p651) target = $region48
        $region47: #{stepwise_vat.3} parent=39 // pred_region
          %s654 = smul.u32 4, %s25
          %s656 = ssub.s32 512, 512
          %657 = vsyncadd %s627, %s656
          %s658 = smul.addr %s654, 128
          %s659 = scalar_lea.hbm %s6, %s658
          %s660 = sshll.u32 %s630, 4
          %s661 = int_to_ptr.vmem [resolvable:$true] %s660
          %666 = dma.vmem_to_hbm [thread:$0]  %s661, 512, %s659, %s627, 128, 128, 8
        $region48: #{stepwise_vat.3} parent=39 // pred_fallthru
          _
        // Predicated region
        $region49: #{stepwise_vat.3} parent=39 // pred_check
          %p667 = pneg %p215
        $region50: #{stepwise_vat.3} parent=39 // pred_check_branch
          %669 = sbr.rel (%p667) target = $region52
        $region51: #{stepwise_vat.3} parent=39 // pred_region
          _
        $region52: #{stepwise_vat.3} parent=39 // pred_fallthru
          _
      $region40: #{stepwise_vat.3} parent=5 // pred_fallthru
        _
      %p670 = scmp.le.s32.totalorder 2, %s20
      // Predicated region
      $region53: #{stepwise_vat.3} parent=5 // pred_check
        %p671 = pneg %p670
      $region54: #{stepwise_vat.3} parent=5 // pred_check_branch
        %673 = sbr.rel (%p671) target = $region56
      $region55: #{stepwise_vat.3} parent=5 // pred_region
        %s674 = ssub.s32 %s20, 2
        // Predicated region
        $region57: #{stepwise_vat.3} parent=55 // pred_check
          %p675 = pneg %p169
        $region58: #{stepwise_vat.3} parent=55 // pred_check_branch
          %677 = sbr.rel (%p675) target = $region60
        $region59: #{stepwise_vat.3} parent=55 // pred_region
          %s678 = sand.u32 %s154, 1
          %s679 = scalar_lea.sflag [#allocation3], %s678
          %s680 = sand.u32 %s154, 1
          %s681 = smul.addr %s680, 32
          %s682 = scalar_lea.vmem [#allocation2], %s681
          %683 = dma.done %s679, 512
        $region60: #{stepwise_vat.3} parent=55 // pred_fallthru
          _
        // Predicated region
        $region61: #{stepwise_vat.3} parent=55 // pred_check
          %p684 = pneg %p195
        $region62: #{stepwise_vat.3} parent=55 // pred_check_branch
          %686 = sbr.rel (%p684) target = $region64
        $region63: #{stepwise_vat.3} parent=55 // pred_region
          %s687 = sand.u32 %s180, 1
          %s688 = scalar_lea.sflag [#allocation5], %s687
          %s689 = sand.u32 %s180, 1
          %s690 = smul.addr %s689, 32
          %s691 = scalar_lea.vmem [#allocation4], %s690
          %692 = dma.done %s688, 512
        $region64: #{stepwise_vat.3} parent=55 // pred_fallthru
          _
        // Predicated region
        $region65: #{stepwise_vat.3} parent=55 // pred_check
          %p693 = pneg %p221
        $region66: #{stepwise_vat.3} parent=55 // pred_check_branch
          %695 = sbr.rel (%p693) target = $region68
        $region67: #{stepwise_vat.3} parent=55 // pred_region
          %p696 = scmp.lt.s32.totalorder %s26, 1
          %s697 = scalar_select %p696, %s26, 1
          %s698 = smul.addr %s697, 8
          %s699 = scalar_lea.vmem %s7, %s698
        $region68: #{stepwise_vat.3} parent=55 // pred_fallthru
          _
      $region56: #{stepwise_vat.3} parent=5 // pred_fallthru
        _
    $region6: #{stepwise_vat.3} parent=1 // loop_footer
      %s24 = sadd.s32 1, %s20
    $region7: #{stepwise_vat.3} parent=1 // loop_footer_branch
      %19 = sbr.rel target = $region3
    $region8: #{stepwise_vat.3} parent=1 // loop_exit
      _
    %700 = vsyncpa [#allocation3], 1
    %s701 = scalar_lea.sflag [#allocation3], 1
    %702 = vsyncpa %s701, 1
    %703 = vsyncpa [#allocation5], 1
    %s704 = scalar_lea.sflag [#allocation5], 1
    %705 = vsyncpa %s704, 1

</llo_original>
